<compile_context>
chip_gen: v5e
topology: v5e:2x2
jax: 0.10.0
libtpu: 0.0.40
codegen_flags: <defaults>
</compile_context>

<pallas_src>
import functools

import jax
import jax.numpy as jnp
from jax.experimental import pallas as pl
from jax.experimental.pallas import tpu as pltpu

EPS = 1e-5


# --------------------------------------------------------------------------- #
# in-kernel helpers
# --------------------------------------------------------------------------- #
def _shift_lanes(a, off):
    """result[:, p] = a[:, p + off] if 0 <= p + off < size else 0 (static off)."""
    if off == 0:
        return a
    c, n = a.shape
    zeros = jnp.zeros((c, abs(off)), a.dtype)
    if off > 0:
        return jnp.concatenate([a[:, off:], zeros], axis=1)
    return jnp.concatenate([zeros, a[:, : n + off]], axis=1)


def _partial_stats(y_f32, st_ref):
    """Per-tile [sum, sum_sq] per channel into st_ref[0] of shape (C, 2)."""
    s = jnp.sum(y_f32, axis=1, keepdims=True)
    ss = jnp.sum(y_f32 * y_f32, axis=1, keepdims=True)
    st_ref[0] = jnp.concatenate([s, ss], axis=1)


def _y3_from_y2(y2_bf16, sc2, sh2, w3_bf16):
    """Shared by pass 3 (stats) and pass 4 (recompute): BN2+ReLU then 1x1 conv."""
    h2 = jnp.maximum(y2_bf16 * sc2 + sh2, 0.0)          # f32 (bf16*f32 -> f32)
    return jnp.dot(w3_bf16, h2.astype(jnp.bfloat16),
                   preferred_element_type=jnp.float32)   # (C3, HW) f32


# --------------------------------------------------------------------------- #
# kernels (one image / grid step, channels-major (C, H*W) tiles)
# --------------------------------------------------------------------------- #
def _conv1_kernel(x_ref, w1_ref, y1_ref, st_ref):
    # 1x1 conv == matmul over channels; bf16 MXU operands, f32 accumulate.
    y = jnp.dot(w1_ref[...], x_ref[0], preferred_element_type=jnp.float32)
    _partial_stats(y, st_ref)                 # stats on the f32 accumulator
    y1_ref[0] = y.astype(jnp.bfloat16)        # bf16 intermediate in HBM


def _conv2_kernel(y1_ref, sc_ref, sh_ref, w2_ref, y2_ref, st_ref, *, W):
    C1, HW = y1_ref.shape[1], y1_ref.shape[2]

    # Fused BN1 (scale/shift FMA) + ReLU in f32, quantized once to bf16 so the
    # whole im2col slab is built in bf16 (half the VMEM / shift traffic).
    h1 = jnp.maximum(y1_ref[0] * sc_ref[...] + sh_ref[...], 0.0)
    h1 = h1.astype(jnp.bfloat16)                                   # (C1, HW)

    # x-position masks for the horizontal taps (the flat shift already zero
    # fills the top/bottom rows; only x-wraparound columns need masking).
    # Materialized once at full width and reused across the three dy values.
    col = jax.lax.broadcasted_iota(jnp.int32, (1, HW), 1)
    xpos = col % W
    mask_l = jnp.broadcast_to((xpos > 0).astype(jnp.bfloat16), (C1, HW))
    mask_r = jnp.broadcast_to((xpos < W - 1).astype(jnp.bfloat16), (C1, HW))

    taps = []
    for dy in range(3):
        for dx in range(3):
            off = (dy - 1) * W + (dx - 1)
            t = _shift_lanes(h1, off)
            if dx == 0:
                t = t * mask_l       # tap reads x-1
            elif dx == 2:
                t = t * mask_r       # tap reads x+1
            taps.append(t)
    patches = jnp.concatenate(taps, axis=0)                        # (9*C1, HW) bf16

    # Single im2col matmul for the whole 3x3 conv (K = 9*C1).
    y = jnp.dot(w2_ref[...], patches, preferred_element_type=jnp.float32)
    _partial_stats(y, st_ref)
    y2_ref[0] = y.astype(jnp.bfloat16)


def _bn3_stats_kernel(y2_ref, sc2_ref, sh2_ref, w3_ref, st_ref):
    # Pass 3: only the BN3 per-tile statistics; y3 is never written to HBM.
    y3 = _y3_from_y2(y2_ref[0], sc2_ref[...], sh2_ref[...], w3_ref[...])
    _partial_stats(y3, st_ref)


def _residual_kernel(y2_ref, sc2_ref, sh2_ref, w3_ref, sc3_ref, sh3_ref,
                     x_ref, o_ref):
    # Pass 4: recompute y3 (identical math to pass 3), BN3 + shortcut + ReLU.
    y3 = _y3_from_y2(y2_ref[0], sc2_ref[...], sh2_ref[...], w3_ref[...])
    o_ref[0] = jnp.maximum(y3 * sc3_ref[...] + sh3_ref[...] + x_ref[0], 0.0)


# --------------------------------------------------------------------------- #
# wrapper
# --------------------------------------------------------------------------- #
def _scale_shift(stats, gamma, beta, count):
    """Reduce per-tile (sum, sumsq) -> fused BN scale/shift (O(C) glue)."""
    s = jnp.sum(stats[:, :, 0], axis=0)
    ss = jnp.sum(stats[:, :, 1], axis=0)
    mean = s / count
    var = jnp.maximum(ss / count - mean * mean, 0.0)   # biased (training) var
    scale = gamma * jax.lax.rsqrt(var + EPS)
    shift = beta - mean * scale
    return scale.reshape(-1, 1), shift.reshape(-1, 1)


@jax.jit
def identity_block_forward(x_nchw, params):
    (w1, b1, g1, be1, w2, b2, g2, be2, w3, b3, g3, be3) = params
    # Conv biases are mathematically cancelled by training-mode BN -> unused.
    del b1, b2, b3

    N, Cin, H, W = x_nchw.shape
    HW = H * W
    C1, C2, C3 = w1.shape[0], w2.shape[0], w3.shape[0]
    assert Cin == C3, "identity block requires Cin == C3 for the residual add"
    count = float(N * HW)

    # Channels-major, lane-dense views (free reshapes of NCHW).
    x_f32 = x_nchw.reshape(N, Cin, HW).astype(jnp.float32)   # shortcut (pass 4)
    x_bf16 = x_f32.astype(jnp.bfloat16)                      # conv1 operand
    w1b = w1.astype(jnp.bfloat16)
    w2b = w2.astype(jnp.bfloat16)
    w3b = w3.astype(jnp.bfloat16)

    cp = pltpu.CompilerParams(dimension_semantics=("parallel",))
    # TODO(synk): re-size this together with HW-halo tiling for v7x's 64 MiB.
    cp2 = pltpu.CompilerParams(dimension_semantics=("parallel",),
                               vmem_limit_bytes=32 * 1024 * 1024)

    def act_spec(c):
        return pl.BlockSpec((1, c, HW), lambda n: (n, 0, 0))

    def whole_spec(shape):
        nd = len(shape)
        return pl.BlockSpec(shape, lambda n: (0,) * nd)

    def stats_spec(c):
        return pl.BlockSpec((1, c, 2), lambda n: (n, 0, 0))

    # ---- pass 1: conv1 (1x1) + BN1 partial stats ---------------------------
    y1, st1 = pl.pallas_call(
        _conv1_kernel,
        grid=(N,),
        in_specs=[act_spec(Cin), whole_spec((C1, Cin))],
        out_specs=[act_spec(C1), stats_spec(C1)],
        out_shape=[jax.ShapeDtypeStruct((N, C1, HW), jnp.bfloat16),
                   jax.ShapeDtypeStruct((N, C1, 2), jnp.float32)],
        compiler_params=cp,
    )(x_bf16, w1b)
    sc1, sh1 = _scale_shift(st1, g1, be1, count)

    # ---- pass 2: BN1+ReLU, 3x3 conv as one im2col matmul, BN2 stats --------
    y2, st2 = pl.pallas_call(
        functools.partial(_conv2_kernel, W=W),
        grid=(N,),
        in_specs=[act_spec(C1), whole_spec((C1, 1)), whole_spec((C1, 1)),
                  whole_spec((C2, 9 * C1))],
        out_specs=[act_spec(C2), stats_spec(C2)],
        out_shape=[jax.ShapeDtypeStruct((N, C2, HW), jnp.bfloat16),
                   jax.ShapeDtypeStruct((N, C2, 2), jnp.float32)],
        compiler_params=cp2,
    )(y1, sc1, sh1, w2b)
    sc2, sh2 = _scale_shift(st2, g2, be2, count)

    # ---- pass 3: BN2+ReLU, conv3 (1x1) -> BN3 stats only (no y3 in HBM) ----
    st3 = pl.pallas_call(
        _bn3_stats_kernel,
        grid=(N,),
        in_specs=[act_spec(C2), whole_spec((C2, 1)), whole_spec((C2, 1)),
                  whole_spec((C3, C2))],
        out_specs=stats_spec(C3),
        out_shape=jax.ShapeDtypeStruct((N, C3, 2), jnp.float32),
        compiler_params=cp,
    )(y2, sc2, sh2, w3b)
    sc3, sh3 = _scale_shift(st3, g3, be3, count)

    # ---- pass 4: recompute y3, BN3 + residual + ReLU, lane-dense output ----
    out_cm = pl.pallas_call(
        _residual_kernel,
        grid=(N,),
        in_specs=[act_spec(C2), whole_spec((C2, 1)), whole_spec((C2, 1)),
                  whole_spec((C3, C2)), whole_spec((C3, 1)), whole_spec((C3, 1)),
                  act_spec(Cin)],
        out_specs=act_spec(C3),
        out_shape=jax.ShapeDtypeStruct((N, C3, HW), jnp.float32),
        compiler_params=cp,
    )(y2, sc2, sh2, w3b, sc3, sh3, x_f32)

    return out_cm.reshape(N, C3, H, W)       # free reshape back to NCHW


# --------------------------------------------------------------------------- #
# parameters (weights stored in kernel-friendly channels-major layout)
# --------------------------------------------------------------------------- #
def init_params(key, identity_block):
    cin, c1, c2, c3 = identity_block
    ks = jax.random.split(key, 6)
    # 1x1 conv weight (Cout, Cin)   == torch_weight[:, :, 0, 0]
    # 3x3 conv weight (Cout, 9*Cin) == torch_weight.permute(0,2,3,1).reshape(Cout, 9*Cin)
    # Fan-in scaling keeps conv-output variance ~1 so BN scales stay ~1.
    w1 = jax.random.normal(ks[0], (c1, cin), jnp.float32) / jnp.sqrt(cin)
    b1 = jax.random.normal(ks[1], (c1,), jnp.float32) * 0.1
    w2 = jax.random.normal(ks[2], (c2, 9 * c1), jnp.float32) / jnp.sqrt(9 * c1)
    b2 = jax.random.normal(ks[3], (c2,), jnp.float32) * 0.1
    w3 = jax.random.normal(ks[4], (c3, c2), jnp.float32) / jnp.sqrt(c2)
    b3 = jax.random.normal(ks[5], (c3,), jnp.float32) * 0.1
    # BatchNorm affine params (PyTorch default init: gamma=1, beta=0)
    g1, be1 = jnp.ones((c1,), jnp.float32), jnp.zeros((c1,), jnp.float32)
    g2, be2 = jnp.ones((c2,), jnp.float32), jnp.zeros((c2,), jnp.float32)
    g3, be3 = jnp.ones((c3,), jnp.float32), jnp.zeros((c3,), jnp.float32)
    return (w1, b1, g1, be1, w2, b2, g2, be2, w3, b3, g3, be3)


# --------------------------------------------------------------------------- #
# pure-JAX reference (full module semantics incl. the conv biases; bf16 matmul
# operands like the kernel, f32 BN / accumulation)
# --------------------------------------------------------------------------- #
def reference_forward(x_nchw, params):
    (w1, b1, g1, be1, w2, b2, g2, be2, w3, b3, g3, be3) = params
    x = jnp.transpose(x_nchw, (0, 2, 3, 1)).astype(jnp.float32)   # NHWC
    N, H, W, _ = x.shape
    C1, C2 = w1.shape[0], w2.shape[0]

    def dot_cm(a, w):   # a: (N,H,W,Cin), w: (Cout,Cin)
        return jnp.einsum('nhwc,dc->nhwd', a.astype(jnp.bfloat16),
                          w.astype(jnp.bfloat16),
                          preferred_element_type=jnp.float32)

    def bn(h, g, be):
        mean = jnp.mean(h, axis=(0, 1, 2), keepdims=True)
        var = jnp.mean((h - mean) ** 2, axis=(0, 1, 2), keepdims=True)
        return (h - mean) * jax.lax.rsqrt(var + EPS) * g + be

    h1 = jax.nn.relu(bn(dot_cm(x, w1) + b1, g1, be1))
    hp = jnp.pad(h1, ((0, 0), (1, 1), (1, 1), (0, 0)))
    acc = jnp.zeros((N, H, W, C2), jnp.float32)
    for dy in range(3):
        for dx in range(3):
            k = dy * 3 + dx
            acc = acc + jnp.einsum(
                'nhwc,dc->nhwd',
                hp[:, dy:dy + H, dx:dx + W, :].astype(jnp.bfloat16),
                w2[:, k * C1:(k + 1) * C1].astype(jnp.bfloat16),
                preferred_element_type=jnp.float32)
    h2 = jax.nn.relu(bn(acc + b2, g2, be2))
    h3 = bn(dot_cm(h2, w3) + b3, g3, be3)
    out = jax.nn.relu(h3 + x)
    return jnp.transpose(out, (0, 3, 1, 2))


if __name__ == "__main__":
    key = jax.random.PRNGKey(0)
    identity_block = (4, 8, 8, 4)        # (Cin, C1, C2, C3); Cin == C3
    kx, kp = jax.random.split(key)
    x = jax.random.normal(kx, (2, 4, 16, 16), jnp.float32)   # NCHW like PyTorch
    params = init_params(kp, identity_block)

    out = jax.block_until_ready(identity_block_forward(x, params))
    ref = jax.block_until_ready(reference_forward(x, params))

    assert out.shape == x.shape
    assert bool(jnp.all(jnp.isfinite(out)))
    # Tolerance budgeted for bf16 MXU operands + bf16 storage of y1/y2
    # amplified through two BN normalizations (~1e-2 worst case here);
    # any structural bug (wrong tap / mask / stats) gives errors >= 0.1.
    err = float(jnp.max(jnp.abs(out - ref)))
    assert jnp.allclose(out, ref, atol=3e-2, rtol=3e-2), \
        f"mismatch vs pure-JAX reference (max abs diff {err})"

    print("KERNEL_OK")
</pallas_src>

<mosaic_0001>
module attributes {stable_mosaic.version = 11 : i64} {
  func.func @_conv1_kernel(%arg0: i32, %arg1: memref<1x4x256xbf16, #tpu.memory_space<vmem>>, %arg2: memref<8x4xbf16, #tpu.memory_space<vmem>>, %arg3: memref<1x8x256xbf16, #tpu.memory_space<vmem>>, %arg4: memref<1x8x2xf32, #tpu.memory_space<vmem>>) attributes {dimension_semantics = [#tpu.dimension_semantics<parallel>], iteration_bounds = array<i64: 2>, scalar_prefetch = 0 : i64, scratch_operands = 0 : i64, tpu.core_type = #tpu.core_type<tc>, window_params = [{transform_indices = @transform_0, window_bounds = array<i64: 1, 4, 256>}, {pipeline_mode = #tpu.pipeline_mode<synchronous>, transform_indices = @transform_1, window_bounds = array<i64: 8, 4>}, {transform_indices = @transform_2, window_bounds = array<i64: 1, 8, 256>}, {transform_indices = @transform_3, window_bounds = array<i64: 1, 8, 2>}]} {
    %c0 = arith.constant 0 : index
    %c0_0 = arith.constant 0 : index
    %0 = vector.load %arg2[%c0, %c0_0] : memref<8x4xbf16, #tpu.memory_space<vmem>>, vector<8x4xbf16>
    %c0_1 = arith.constant 0 : index
    %c0_2 = arith.constant 0 : index
    %c0_3 = arith.constant 0 : index
    %1 = vector.load %arg1[%c0_1, %c0_2, %c0_3] : memref<1x4x256xbf16, #tpu.memory_space<vmem>>, vector<1x4x256xbf16>
    %2 = vector.shape_cast %1 : vector<1x4x256xbf16> to vector<4x256xbf16>
    %cst = arith.constant dense<0.000000e+00> : vector<8x256xf32>
    %3 = tpu.matmul %0, %2, %cst {dimension_numbers = #tpu.dot_dimension_numbers<[1], [0], [0], [1], [0, 0, 1, 1], [], []>} : vector<8x4xbf16>, vector<4x256xbf16>, vector<8x256xf32> -> vector<8x256xf32>
    %cst_4 = arith.constant dense<0.000000e+00> : vector<8xf32>
    %4 = vector.multi_reduction <add>, %3, %cst_4 [1] : vector<8x256xf32> to vector<8xf32>
    %5 = vector.shape_cast %4 : vector<8xf32> to vector<8x1xf32>
    %6 = arith.mulf %3, %3 : vector<8x256xf32>
    %cst_5 = arith.constant dense<0.000000e+00> : vector<8xf32>
    %7 = vector.multi_reduction <add>, %6, %cst_5 [1] : vector<8x256xf32> to vector<8xf32>
    %8 = vector.shape_cast %7 : vector<8xf32> to vector<8x1xf32>
    %9 = tpu.concatenate %5, %8 in 1 : vector<8x1xf32>, vector<8x1xf32> -> vector<8x2xf32>
    %c0_6 = arith.constant 0 : index
    %c0_7 = arith.constant 0 : index
    %c0_8 = arith.constant 0 : index
    %10 = vector.load %arg4[%c0_6, %c0_7, %c0_8] : memref<1x8x2xf32, #tpu.memory_space<vmem>>, vector<1x8x2xf32>
    %11 = vector.shape_cast %10 : vector<1x8x2xf32> to vector<8x2xf32>
    %12 = vector.shape_cast %9 : vector<8x2xf32> to vector<1x8x2xf32>
    tpu.vector_store %arg4[%c0_6, %c0_7, %c0_8], %12 {strides = array<i32>} : memref<1x8x2xf32, #tpu.memory_space<vmem>>, vector<1x8x2xf32>,
    %13 = arith.truncf %3 : vector<8x256xf32> to vector<8x256xbf16>
    %c0_9 = arith.constant 0 : index
    %c0_10 = arith.constant 0 : index
    %c0_11 = arith.constant 0 : index
    %14 = vector.load %arg3[%c0_9, %c0_10, %c0_11] : memref<1x8x256xbf16, #tpu.memory_space<vmem>>, vector<1x8x256xbf16>
    %15 = vector.shape_cast %14 : vector<1x8x256xbf16> to vector<8x256xbf16>
    %16 = vector.shape_cast %13 : vector<8x256xbf16> to vector<1x8x256xbf16>
    tpu.vector_store %arg3[%c0_9, %c0_10, %c0_11], %16 {strides = array<i32>} : memref<1x8x256xbf16, #tpu.memory_space<vmem>>, vector<1x8x256xbf16>,
    return
  }
  func.func @transform_0(%arg0: i32) -> (i32, i32, i32) {
    %c0_i32 = arith.constant 0 : i32
    %c0_i32_0 = arith.constant 0 : i32
    %c0_i32_1 = arith.constant 0 : i32
    return %arg0, %c0_i32, %c0_i32_0 : i32, i32, i32
  }
  func.func @transform_1(%arg0: i32) -> (i32, i32) {
    %c0_i32 = arith.constant 0 : i32
    %c0_i32_0 = arith.constant 0 : i32
    %c0_i32_1 = arith.constant 0 : i32
    return %c0_i32, %c0_i32_0 : i32, i32
  }
  func.func @transform_2(%arg0: i32) -> (i32, i32, i32) {
    %c0_i32 = arith.constant 0 : i32
    %c0_i32_0 = arith.constant 0 : i32
    %c0_i32_1 = arith.constant 0 : i32
    return %arg0, %c0_i32, %c0_i32_0 : i32, i32, i32
  }
  func.func @transform_3(%arg0: i32) -> (i32, i32, i32) {
    %c0_i32 = arith.constant 0 : i32
    %c0_i32_0 = arith.constant 0 : i32
    %c0_i32_1 = arith.constant 0 : i32
    return %arg0, %c0_i32, %c0_i32_0 : i32, i32, i32
  }
}

module attributes {stable_mosaic.version = 11 : i64} {
  func.func @_conv2_kernel(%arg0: i32, %arg1: memref<1x8x256xbf16, #tpu.memory_space<vmem>>, %arg2: memref<8x1xf32, #tpu.memory_space<vmem>>, %arg3: memref<8x1xf32, #tpu.memory_space<vmem>>, %arg4: memref<8x72xbf16, #tpu.memory_space<vmem>>, %arg5: memref<1x8x256xbf16, #tpu.memory_space<vmem>>, %arg6: memref<1x8x2xf32, #tpu.memory_space<vmem>>) attributes {dimension_semantics = [#tpu.dimension_semantics<parallel>], iteration_bounds = array<i64: 2>, scalar_prefetch = 0 : i64, scratch_operands = 0 : i64, tpu.core_type = #tpu.core_type<tc>, window_params = [{transform_indices = @transform_0, window_bounds = array<i64: 1, 8, 256>}, {pipeline_mode = #tpu.pipeline_mode<synchronous>, transform_indices = @transform_1, window_bounds = array<i64: 8, 1>}, {pipeline_mode = #tpu.pipeline_mode<synchronous>, transform_indices = @transform_2, window_bounds = array<i64: 8, 1>}, {pipeline_mode = #tpu.pipeline_mode<synchronous>, transform_indices = @transform_3, window_bounds = array<i64: 8, 72>}, {transform_indices = @transform_4, window_bounds = array<i64: 1, 8, 256>}, {transform_indices = @transform_5, window_bounds = array<i64: 1, 8, 2>}]} {
    %c0 = arith.constant 0 : index
    %c0_0 = arith.constant 0 : index
    %c0_1 = arith.constant 0 : index
    %0 = vector.load %arg1[%c0, %c0_0, %c0_1] : memref<1x8x256xbf16, #tpu.memory_space<vmem>>, vector<1x8x256xbf16>
    %1 = vector.shape_cast %0 : vector<1x8x256xbf16> to vector<8x256xbf16>
    %c0_2 = arith.constant 0 : index
    %c0_3 = arith.constant 0 : index
    %2 = vector.load %arg2[%c0_2, %c0_3] : memref<8x1xf32, #tpu.memory_space<vmem>>, vector<8x1xf32>
    %3 = arith.extf %1 : vector<8x256xbf16> to vector<8x256xf32>
    %4 = vector.broadcast %2 : vector<8x1xf32> to vector<8x256xf32>
    %5 = arith.mulf %3, %4 : vector<8x256xf32>
    %c0_4 = arith.constant 0 : index
    %c0_5 = arith.constant 0 : index
    %6 = vector.load %arg3[%c0_4, %c0_5] : memref<8x1xf32, #tpu.memory_space<vmem>>, vector<8x1xf32>
    %7 = vector.broadcast %6 : vector<8x1xf32> to vector<8x256xf32>
    %8 = arith.addf %5, %7 : vector<8x256xf32>
    %cst = arith.constant 0.000000e+00 : f32
    %9 = vector.broadcast %cst : f32 to vector<8x256xf32>
    %10 = arith.maximumf %8, %9 : vector<8x256xf32>
    %11 = arith.truncf %10 : vector<8x256xf32> to vector<8x256xbf16>
    %12 = tpu.iota {dimensions = array<i32: 1>} : vector<1x256xi32>
    %c16_i32 = arith.constant 16 : i32
    %c0_i32 = arith.constant 0 : i32
    %13 = arith.cmpi eq, %c16_i32, %c0_i32 : i32
    %c1_i32 = arith.constant 1 : i32
    %14 = arith.select %13, %c1_i32, %c16_i32 : i32
    %15 = vector.broadcast %14 : i32 to vector<1x256xi32>
    %16 = arith.remsi %12, %15 : vector<1x256xi32>
    %c0_i32_6 = arith.constant 0 : i32
    %17 = vector.broadcast %c0_i32_6 : i32 to vector<1x256xi32>
    %18 = arith.cmpi ne, %16, %17 : vector<1x256xi32>
    %c0_i32_7 = arith.constant 0 : i32
    %19 = vector.broadcast %c0_i32_7 : i32 to vector<1x256xi32>
    %20 = arith.cmpi slt, %16, %19 : vector<1x256xi32>
    %c0_i32_8 = arith.constant 0 : i32
    %21 = arith.cmpi slt, %14, %c0_i32_8 : i32
    %22 = vector.broadcast %21 : i1 to vector<1x256xi1>
    %23 = vector.broadcast %22 : vector<1x256xi1> to vector<1x256xi1>
    %24 = arith.xori %20, %23 : vector<1x256xi1>
    %25 = arith.andi %24, %18 : vector<1x256xi1>
    %26 = vector.broadcast %14 : i32 to vector<1x256xi32>
    %27 = arith.addi %16, %26 : vector<1x256xi32>
    %28 = arith.select %25, %27, %16 : vector<1x256xi1>, vector<1x256xi32>
    %c0_i32_9 = arith.constant 0 : i32
    %29 = vector.broadcast %c0_i32_9 : i32 to vector<1x256xi32>
    %30 = arith.cmpi sgt, %28, %29 : vector<1x256xi32>
    %31 = arith.extui %30 : vector<1x256xi1> to vector<1x256xi32>
    %32 = arith.sitofp %31 : vector<1x256xi32> to vector<1x256xf32>
    %33 = arith.truncf %32 : vector<1x256xf32> to vector<1x256xbf16>
    %34 = vector.shape_cast %33 : vector<1x256xbf16> to vector<1x256xbf16>
    %35 = vector.broadcast %34 : vector<1x256xbf16> to vector<8x256xbf16>
    %c15_i32 = arith.constant 15 : i32
    %36 = vector.broadcast %c15_i32 : i32 to vector<1x256xi32>
    %37 = arith.cmpi slt, %28, %36 : vector<1x256xi32>
    %38 = arith.extui %37 : vector<1x256xi1> to vector<1x256xi32>
    %39 = arith.sitofp %38 : vector<1x256xi32> to vector<1x256xf32>
    %40 = arith.truncf %39 : vector<1x256xf32> to vector<1x256xbf16>
    %41 = vector.shape_cast %40 : vector<1x256xbf16> to vector<1x256xbf16>
    %42 = vector.broadcast %41 : vector<1x256xbf16> to vector<8x256xbf16>
    %cst_10 = arith.constant 0.000000e+00 : bf16
    %43 = vector.broadcast %cst_10 : bf16 to vector<8x17xbf16>
    %44 = vector.extract_strided_slice %11 {offsets = [0, 0], sizes = [8, 239], strides = [1, 1]} : vector<8x256xbf16> to vector<8x239xbf16>
    %45 = tpu.concatenate %43, %44 in 1 : vector<8x17xbf16>, vector<8x239xbf16> -> vector<8x256xbf16>
    %46 = arith.mulf %45, %35 : vector<8x256xbf16>
    %cst_11 = arith.constant 0.000000e+00 : bf16
    %47 = vector.broadcast %cst_11 : bf16 to vector<8x16xbf16>
    %48 = vector.extract_strided_slice %11 {offsets = [0, 0], sizes = [8, 240], strides = [1, 1]} : vector<8x256xbf16> to vector<8x240xbf16>
    %49 = tpu.concatenate %47, %48 in 1 : vector<8x16xbf16>, vector<8x240xbf16> -> vector<8x256xbf16>
    %cst_12 = arith.constant 0.000000e+00 : bf16
    %50 = vector.broadcast %cst_12 : bf16 to vector<8x15xbf16>
    %51 = vector.extract_strided_slice %11 {offsets = [0, 0], sizes = [8, 241], strides = [1, 1]} : vector<8x256xbf16> to vector<8x241xbf16>
    %52 = tpu.concatenate %50, %51 in 1 : vector<8x15xbf16>, vector<8x241xbf16> -> vector<8x256xbf16>
    %53 = arith.mulf %52, %42 : vector<8x256xbf16>
    %cst_13 = arith.constant 0.000000e+00 : bf16
    %54 = vector.broadcast %cst_13 : bf16 to vector<8x1xbf16>
    %55 = vector.extract_strided_slice %11 {offsets = [0, 0], sizes = [8, 255], strides = [1, 1]} : vector<8x256xbf16> to vector<8x255xbf16>
    %56 = tpu.concatenate %54, %55 in 1 : vector<8x1xbf16>, vector<8x255xbf16> -> vector<8x256xbf16>
    %57 = arith.mulf %56, %35 : vector<8x256xbf16>
    %cst_14 = arith.constant 0.000000e+00 : bf16
    %58 = vector.broadcast %cst_14 : bf16 to vector<8x1xbf16>
    %59 = vector.extract_strided_slice %11 {offsets = [0, 1], sizes = [8, 255], strides = [1, 1]} : vector<8x256xbf16> to vector<8x255xbf16>
    %60 = tpu.concatenate %59, %58 in 1 : vector<8x255xbf16>, vector<8x1xbf16> -> vector<8x256xbf16>
    %61 = arith.mulf %60, %42 : vector<8x256xbf16>
    %cst_15 = arith.constant 0.000000e+00 : bf16
    %62 = vector.broadcast %cst_15 : bf16 to vector<8x15xbf16>
    %63 = vector.extract_strided_slice %11 {offsets = [0, 15], sizes = [8, 241], strides = [1, 1]} : vector<8x256xbf16> to vector<8x241xbf16>
    %64 = tpu.concatenate %63, %62 in 1 : vector<8x241xbf16>, vector<8x15xbf16> -> vector<8x256xbf16>
    %65 = arith.mulf %64, %35 : vector<8x256xbf16>
    %cst_16 = arith.constant 0.000000e+00 : bf16
    %66 = vector.broadcast %cst_16 : bf16 to vector<8x16xbf16>
    %67 = vector.extract_strided_slice %11 {offsets = [0, 16], sizes = [8, 240], strides = [1, 1]} : vector<8x256xbf16> to vector<8x240xbf16>
    %68 = tpu.concatenate %67, %66 in 1 : vector<8x240xbf16>, vector<8x16xbf16> -> vector<8x256xbf16>
    %cst_17 = arith.constant 0.000000e+00 : bf16
    %69 = vector.broadcast %cst_17 : bf16 to vector<8x17xbf16>
    %70 = vector.extract_strided_slice %11 {offsets = [0, 17], sizes = [8, 239], strides = [1, 1]} : vector<8x256xbf16> to vector<8x239xbf16>
    %71 = tpu.concatenate %70, %69 in 1 : vector<8x239xbf16>, vector<8x17xbf16> -> vector<8x256xbf16>
    %72 = arith.mulf %71, %42 : vector<8x256xbf16>
    %73 = tpu.concatenate %46, %49, %53, %57, %11, %61, %65, %68, %72 in 0 : vector<8x256xbf16>, vector<8x256xbf16>, vector<8x256xbf16>, vector<8x256xbf16>, vector<8x256xbf16>, vector<8x256xbf16>, vector<8x256xbf16>, vector<8x256xbf16>, vector<8x256xbf16> -> vector<72x256xbf16>
    %c0_18 = arith.constant 0 : index
    %c0_19 = arith.constant 0 : index
    %74 = vector.load %arg4[%c0_18, %c0_19] : memref<8x72xbf16, #tpu.memory_space<vmem>>, vector<8x72xbf16>
    %cst_20 = arith.constant dense<0.000000e+00> : vector<8x256xf32>
    %75 = tpu.matmul %74, %73, %cst_20 {dimension_numbers = #tpu.dot_dimension_numbers<[1], [0], [0], [1], [0, 0, 1, 1], [], []>} : vector<8x72xbf16>, vector<72x256xbf16>, vector<8x256xf32> -> vector<8x256xf32>
    %cst_21 = arith.constant dense<0.000000e+00> : vector<8xf32>
    %76 = vector.multi_reduction <add>, %75, %cst_21 [1] : vector<8x256xf32> to vector<8xf32>
    %77 = vector.shape_cast %76 : vector<8xf32> to vector<8x1xf32>
    %78 = arith.mulf %75, %75 : vector<8x256xf32>
    %cst_22 = arith.constant dense<0.000000e+00> : vector<8xf32>
    %79 = vector.multi_reduction <add>, %78, %cst_22 [1] : vector<8x256xf32> to vector<8xf32>
    %80 = vector.shape_cast %79 : vector<8xf32> to vector<8x1xf32>
    %81 = tpu.concatenate %77, %80 in 1 : vector<8x1xf32>, vector<8x1xf32> -> vector<8x2xf32>
    %c0_23 = arith.constant 0 : index
    %c0_24 = arith.constant 0 : index
    %c0_25 = arith.constant 0 : index
    %82 = vector.load %arg6[%c0_23, %c0_24, %c0_25] : memref<1x8x2xf32, #tpu.memory_space<vmem>>, vector<1x8x2xf32>
    %83 = vector.shape_cast %82 : vector<1x8x2xf32> to vector<8x2xf32>
    %84 = vector.shape_cast %81 : vector<8x2xf32> to vector<1x8x2xf32>
    tpu.vector_store %arg6[%c0_23, %c0_24, %c0_25], %84 {strides = array<i32>} : memref<1x8x2xf32, #tpu.memory_space<vmem>>, vector<1x8x2xf32>,
    %85 = arith.truncf %75 : vector<8x256xf32> to vector<8x256xbf16>
    %c0_26 = arith.constant 0 : index
    %c0_27 = arith.constant 0 : index
    %c0_28 = arith.constant 0 : index
    %86 = vector.load %arg5[%c0_26, %c0_27, %c0_28] : memref<1x8x256xbf16, #tpu.memory_space<vmem>>, vector<1x8x256xbf16>
    %87 = vector.shape_cast %86 : vector<1x8x256xbf16> to vector<8x256xbf16>
    %88 = vector.shape_cast %85 : vector<8x256xbf16> to vector<1x8x256xbf16>
    tpu.vector_store %arg5[%c0_26, %c0_27, %c0_28], %88 {strides = array<i32>} : memref<1x8x256xbf16, #tpu.memory_space<vmem>>, vector<1x8x256xbf16>,
    return
  }
  func.func @transform_0(%arg0: i32) -> (i32, i32, i32) {
    %c0_i32 = arith.constant 0 : i32
    %c0_i32_0 = arith.constant 0 : i32
    %c0_i32_1 = arith.constant 0 : i32
    return %arg0, %c0_i32, %c0_i32_0 : i32, i32, i32
  }
  func.func @transform_1(%arg0: i32) -> (i32, i32) {
    %c0_i32 = arith.constant 0 : i32
    %c0_i32_0 = arith.constant 0 : i32
    %c0_i32_1 = arith.constant 0 : i32
    return %c0_i32, %c0_i32_0 : i32, i32
  }
  func.func @transform_2(%arg0: i32) -> (i32, i32) {
    %c0_i32 = arith.constant 0 : i32
    %c0_i32_0 = arith.constant 0 : i32
    %c0_i32_1 = arith.constant 0 : i32
    return %c0_i32, %c0_i32_0 : i32, i32
  }
  func.func @transform_3(%arg0: i32) -> (i32, i32) {
    %c0_i32 = arith.constant 0 : i32
    %c0_i32_0 = arith.constant 0 : i32
    %c0_i32_1 = arith.constant 0 : i32
    return %c0_i32, %c0_i32_0 : i32, i32
  }
  func.func @transform_4(%arg0: i32) -> (i32, i32, i32) {
    %c0_i32 = arith.constant 0 : i32
    %c0_i32_0 = arith.constant 0 : i32
    %c0_i32_1 = arith.constant 0 : i32
    return %arg0, %c0_i32, %c0_i32_0 : i32, i32, i32
  }
  func.func @transform_5(%arg0: i32) -> (i32, i32, i32) {
    %c0_i32 = arith.constant 0 : i32
    %c0_i32_0 = arith.constant 0 : i32
    %c0_i32_1 = arith.constant 0 : i32
    return %arg0, %c0_i32, %c0_i32_0 : i32, i32, i32
  }
}

module attributes {stable_mosaic.version = 11 : i64} {
  func.func @_bn3_stats_kernel(%arg0: i32, %arg1: memref<1x8x256xbf16, #tpu.memory_space<vmem>>, %arg2: memref<8x1xf32, #tpu.memory_space<vmem>>, %arg3: memref<8x1xf32, #tpu.memory_space<vmem>>, %arg4: memref<4x8xbf16, #tpu.memory_space<vmem>>, %arg5: memref<1x4x2xf32, #tpu.memory_space<vmem>>) attributes {dimension_semantics = [#tpu.dimension_semantics<parallel>], iteration_bounds = array<i64: 2>, scalar_prefetch = 0 : i64, scratch_operands = 0 : i64, tpu.core_type = #tpu.core_type<tc>, window_params = [{transform_indices = @transform_0, window_bounds = array<i64: 1, 8, 256>}, {pipeline_mode = #tpu.pipeline_mode<synchronous>, transform_indices = @transform_1, window_bounds = array<i64: 8, 1>}, {pipeline_mode = #tpu.pipeline_mode<synchronous>, transform_indices = @transform_2, window_bounds = array<i64: 8, 1>}, {pipeline_mode = #tpu.pipeline_mode<synchronous>, transform_indices = @transform_3, window_bounds = array<i64: 4, 8>}, {transform_indices = @transform_4, window_bounds = array<i64: 1, 4, 2>}]} {
    %c0 = arith.constant 0 : index
    %c0_0 = arith.constant 0 : index
    %c0_1 = arith.constant 0 : index
    %0 = vector.load %arg1[%c0, %c0_0, %c0_1] : memref<1x8x256xbf16, #tpu.memory_space<vmem>>, vector<1x8x256xbf16>
    %1 = vector.shape_cast %0 : vector<1x8x256xbf16> to vector<8x256xbf16>
    %c0_2 = arith.constant 0 : index
    %c0_3 = arith.constant 0 : index
    %2 = vector.load %arg2[%c0_2, %c0_3] : memref<8x1xf32, #tpu.memory_space<vmem>>, vector<8x1xf32>
    %c0_4 = arith.constant 0 : index
    %c0_5 = arith.constant 0 : index
    %3 = vector.load %arg3[%c0_4, %c0_5] : memref<8x1xf32, #tpu.memory_space<vmem>>, vector<8x1xf32>
    %c0_6 = arith.constant 0 : index
    %c0_7 = arith.constant 0 : index
    %4 = vector.load %arg4[%c0_6, %c0_7] : memref<4x8xbf16, #tpu.memory_space<vmem>>, vector<4x8xbf16>
    %5 = arith.extf %1 : vector<8x256xbf16> to vector<8x256xf32>
    %6 = vector.broadcast %2 : vector<8x1xf32> to vector<8x256xf32>
    %7 = arith.mulf %5, %6 : vector<8x256xf32>
    %8 = vector.broadcast %3 : vector<8x1xf32> to vector<8x256xf32>
    %9 = arith.addf %7, %8 : vector<8x256xf32>
    %cst = arith.constant 0.000000e+00 : f32
    %10 = vector.broadcast %cst : f32 to vector<8x256xf32>
    %11 = arith.maximumf %9, %10 : vector<8x256xf32>
    %12 = arith.truncf %11 : vector<8x256xf32> to vector<8x256xbf16>
    %cst_8 = arith.constant dense<0.000000e+00> : vector<4x256xf32>
    %13 = tpu.matmul %4, %12, %cst_8 {dimension_numbers = #tpu.dot_dimension_numbers<[1], [0], [0], [1], [0, 0, 1, 1], [], []>} : vector<4x8xbf16>, vector<8x256xbf16>, vector<4x256xf32> -> vector<4x256xf32>
    %cst_9 = arith.constant dense<0.000000e+00> : vector<4xf32>
    %14 = vector.multi_reduction <add>, %13, %cst_9 [1] : vector<4x256xf32> to vector<4xf32>
    %15 = vector.shape_cast %14 : vector<4xf32> to vector<4x1xf32>
    %16 = arith.mulf %13, %13 : vector<4x256xf32>
    %cst_10 = arith.constant dense<0.000000e+00> : vector<4xf32>
    %17 = vector.multi_reduction <add>, %16, %cst_10 [1] : vector<4x256xf32> to vector<4xf32>
    %18 = vector.shape_cast %17 : vector<4xf32> to vector<4x1xf32>
    %19 = tpu.concatenate %15, %18 in 1 : vector<4x1xf32>, vector<4x1xf32> -> vector<4x2xf32>
    %c0_11 = arith.constant 0 : index
    %c0_12 = arith.constant 0 : index
    %c0_13 = arith.constant 0 : index
    %20 = vector.load %arg5[%c0_11, %c0_12, %c0_13] : memref<1x4x2xf32, #tpu.memory_space<vmem>>, vector<1x4x2xf32>
    %21 = vector.shape_cast %20 : vector<1x4x2xf32> to vector<4x2xf32>
    %22 = vector.shape_cast %19 : vector<4x2xf32> to vector<1x4x2xf32>
    tpu.vector_store %arg5[%c0_11, %c0_12, %c0_13], %22 {strides = array<i32>} : memref<1x4x2xf32, #tpu.memory_space<vmem>>, vector<1x4x2xf32>,
    return
  }
  func.func @transform_0(%arg0: i32) -> (i32, i32, i32) {
    %c0_i32 = arith.constant 0 : i32
    %c0_i32_0 = arith.constant 0 : i32
    %c0_i32_1 = arith.constant 0 : i32
    return %arg0, %c0_i32, %c0_i32_0 : i32, i32, i32
  }
  func.func @transform_1(%arg0: i32) -> (i32, i32) {
    %c0_i32 = arith.constant 0 : i32
    %c0_i32_0 = arith.constant 0 : i32
    %c0_i32_1 = arith.constant 0 : i32
    return %c0_i32, %c0_i32_0 : i32, i32
  }
  func.func @transform_2(%arg0: i32) -> (i32, i32) {
    %c0_i32 = arith.constant 0 : i32
    %c0_i32_0 = arith.constant 0 : i32
    %c0_i32_1 = arith.constant 0 : i32
    return %c0_i32, %c0_i32_0 : i32, i32
  }
  func.func @transform_3(%arg0: i32) -> (i32, i32) {
    %c0_i32 = arith.constant 0 : i32
    %c0_i32_0 = arith.constant 0 : i32
    %c0_i32_1 = arith.constant 0 : i32
    return %c0_i32, %c0_i32_0 : i32, i32
  }
  func.func @transform_4(%arg0: i32) -> (i32, i32, i32) {
    %c0_i32 = arith.constant 0 : i32
    %c0_i32_0 = arith.constant 0 : i32
    %c0_i32_1 = arith.constant 0 : i32
    return %arg0, %c0_i32, %c0_i32_0 : i32, i32, i32
  }
}

module attributes {stable_mosaic.version = 11 : i64} {
  func.func @_residual_kernel(%arg0: i32, %arg1: memref<1x8x256xbf16, #tpu.memory_space<vmem>>, %arg2: memref<8x1xf32, #tpu.memory_space<vmem>>, %arg3: memref<8x1xf32, #tpu.memory_space<vmem>>, %arg4: memref<4x8xbf16, #tpu.memory_space<vmem>>, %arg5: memref<4x1xf32, #tpu.memory_space<vmem>>, %arg6: memref<4x1xf32, #tpu.memory_space<vmem>>, %arg7: memref<1x4x256xf32, #tpu.memory_space<vmem>>, %arg8: memref<1x4x256xf32, #tpu.memory_space<vmem>>) attributes {dimension_semantics = [#tpu.dimension_semantics<parallel>], iteration_bounds = array<i64: 2>, scalar_prefetch = 0 : i64, scratch_operands = 0 : i64, tpu.core_type = #tpu.core_type<tc>, window_params = [{transform_indices = @transform_0, window_bounds = array<i64: 1, 8, 256>}, {pipeline_mode = #tpu.pipeline_mode<synchronous>, transform_indices = @transform_1, window_bounds = array<i64: 8, 1>}, {pipeline_mode = #tpu.pipeline_mode<synchronous>, transform_indices = @transform_2, window_bounds = array<i64: 8, 1>}, {pipeline_mode = #tpu.pipeline_mode<synchronous>, transform_indices = @transform_3, window_bounds = array<i64: 4, 8>}, {pipeline_mode = #tpu.pipeline_mode<synchronous>, transform_indices = @transform_4, window_bounds = array<i64: 4, 1>}, {pipeline_mode = #tpu.pipeline_mode<synchronous>, transform_indices = @transform_5, window_bounds = array<i64: 4, 1>}, {transform_indices = @transform_6, window_bounds = array<i64: 1, 4, 256>}, {transform_indices = @transform_7, window_bounds = array<i64: 1, 4, 256>}]} {
    %c0 = arith.constant 0 : index
    %c0_0 = arith.constant 0 : index
    %c0_1 = arith.constant 0 : index
    %0 = vector.load %arg1[%c0, %c0_0, %c0_1] : memref<1x8x256xbf16, #tpu.memory_space<vmem>>, vector<1x8x256xbf16>
    %1 = vector.shape_cast %0 : vector<1x8x256xbf16> to vector<8x256xbf16>
    %c0_2 = arith.constant 0 : index
    %c0_3 = arith.constant 0 : index
    %2 = vector.load %arg2[%c0_2, %c0_3] : memref<8x1xf32, #tpu.memory_space<vmem>>, vector<8x1xf32>
    %c0_4 = arith.constant 0 : index
    %c0_5 = arith.constant 0 : index
    %3 = vector.load %arg3[%c0_4, %c0_5] : memref<8x1xf32, #tpu.memory_space<vmem>>, vector<8x1xf32>
    %c0_6 = arith.constant 0 : index
    %c0_7 = arith.constant 0 : index
    %4 = vector.load %arg4[%c0_6, %c0_7] : memref<4x8xbf16, #tpu.memory_space<vmem>>, vector<4x8xbf16>
    %5 = arith.extf %1 : vector<8x256xbf16> to vector<8x256xf32>
    %6 = vector.broadcast %2 : vector<8x1xf32> to vector<8x256xf32>
    %7 = arith.mulf %5, %6 : vector<8x256xf32>
    %8 = vector.broadcast %3 : vector<8x1xf32> to vector<8x256xf32>
    %9 = arith.addf %7, %8 : vector<8x256xf32>
    %cst = arith.constant 0.000000e+00 : f32
    %10 = vector.broadcast %cst : f32 to vector<8x256xf32>
    %11 = arith.maximumf %9, %10 : vector<8x256xf32>
    %12 = arith.truncf %11 : vector<8x256xf32> to vector<8x256xbf16>
    %cst_8 = arith.constant dense<0.000000e+00> : vector<4x256xf32>
    %13 = tpu.matmul %4, %12, %cst_8 {dimension_numbers = #tpu.dot_dimension_numbers<[1], [0], [0], [1], [0, 0, 1, 1], [], []>} : vector<4x8xbf16>, vector<8x256xbf16>, vector<4x256xf32> -> vector<4x256xf32>
    %c0_9 = arith.constant 0 : index
    %c0_10 = arith.constant 0 : index
    %14 = vector.load %arg5[%c0_9, %c0_10] : memref<4x1xf32, #tpu.memory_space<vmem>>, vector<4x1xf32>
    %15 = vector.broadcast %14 : vector<4x1xf32> to vector<4x256xf32>
    %16 = arith.mulf %13, %15 : vector<4x256xf32>
    %c0_11 = arith.constant 0 : index
    %c0_12 = arith.constant 0 : index
    %17 = vector.load %arg6[%c0_11, %c0_12] : memref<4x1xf32, #tpu.memory_space<vmem>>, vector<4x1xf32>
    %18 = vector.broadcast %17 : vector<4x1xf32> to vector<4x256xf32>
    %19 = arith.addf %16, %18 : vector<4x256xf32>
    %c0_13 = arith.constant 0 : index
    %c0_14 = arith.constant 0 : index
    %c0_15 = arith.constant 0 : index
    %20 = vector.load %arg7[%c0_13, %c0_14, %c0_15] : memref<1x4x256xf32, #tpu.memory_space<vmem>>, vector<1x4x256xf32>
    %21 = vector.shape_cast %20 : vector<1x4x256xf32> to vector<4x256xf32>
    %22 = arith.addf %19, %21 : vector<4x256xf32>
    %cst_16 = arith.constant 0.000000e+00 : f32
    %23 = vector.broadcast %cst_16 : f32 to vector<4x256xf32>
    %24 = arith.maximumf %22, %23 : vector<4x256xf32>
    %c0_17 = arith.constant 0 : index
    %c0_18 = arith.constant 0 : index
    %c0_19 = arith.constant 0 : index
    %25 = vector.load %arg8[%c0_17, %c0_18, %c0_19] : memref<1x4x256xf32, #tpu.memory_space<vmem>>, vector<1x4x256xf32>
    %26 = vector.shape_cast %25 : vector<1x4x256xf32> to vector<4x256xf32>
    %27 = vector.shape_cast %24 : vector<4x256xf32> to vector<1x4x256xf32>
    tpu.vector_store %arg8[%c0_17, %c0_18, %c0_19], %27 {strides = array<i32>} : memref<1x4x256xf32, #tpu.memory_space<vmem>>, vector<1x4x256xf32>,
    return
  }
  func.func @transform_0(%arg0: i32) -> (i32, i32, i32) {
    %c0_i32 = arith.constant 0 : i32
    %c0_i32_0 = arith.constant 0 : i32
    %c0_i32_1 = arith.constant 0 : i32
    return %arg0, %c0_i32, %c0_i32_0 : i32, i32, i32
  }
  func.func @transform_1(%arg0: i32) -> (i32, i32) {
    %c0_i32 = arith.constant 0 : i32
    %c0_i32_0 = arith.constant 0 : i32
    %c0_i32_1 = arith.constant 0 : i32
    return %c0_i32, %c0_i32_0 : i32, i32
  }
  func.func @transform_2(%arg0: i32) -> (i32, i32) {
    %c0_i32 = arith.constant 0 : i32
    %c0_i32_0 = arith.constant 0 : i32
    %c0_i32_1 = arith.constant 0 : i32
    return %c0_i32, %c0_i32_0 : i32, i32
  }
  func.func @transform_3(%arg0: i32) -> (i32, i32) {
    %c0_i32 = arith.constant 0 : i32
    %c0_i32_0 = arith.constant 0 : i32
    %c0_i32_1 = arith.constant 0 : i32
    return %c0_i32, %c0_i32_0 : i32, i32
  }
  func.func @transform_4(%arg0: i32) -> (i32, i32) {
    %c0_i32 = arith.constant 0 : i32
    %c0_i32_0 = arith.constant 0 : i32
    %c0_i32_1 = arith.constant 0 : i32
    return %c0_i32, %c0_i32_0 : i32, i32
  }
  func.func @transform_5(%arg0: i32) -> (i32, i32) {
    %c0_i32 = arith.constant 0 : i32
    %c0_i32_0 = arith.constant 0 : i32
    %c0_i32_1 = arith.constant 0 : i32
    return %c0_i32, %c0_i32_0 : i32, i32
  }
  func.func @transform_6(%arg0: i32) -> (i32, i32, i32) {
    %c0_i32 = arith.constant 0 : i32
    %c0_i32_0 = arith.constant 0 : i32
    %c0_i32_1 = arith.constant 0 : i32
    return %arg0, %c0_i32, %c0_i32_0 : i32, i32, i32
  }
  func.func @transform_7(%arg0: i32) -> (i32, i32, i32) {
    %c0_i32 = arith.constant 0 : i32
    %c0_i32_0 = arith.constant 0 : i32
    %c0_i32_1 = arith.constant 0 : i32
    return %arg0, %c0_i32, %c0_i32_0 : i32, i32, i32
  }
}

</mosaic_0001>

<llo_original>
// kernel: identity_block_forward.4
$region0: #{identity_block_forward.4}
  #allocation0 [shape = 'u32[]', space=smem, size = 0x4, offset = 0x4, fixed_abs, tag = 'smem constant byte address 0x4 - core index']
  #allocation1 [shape = 'u32[72,128]{1,0:T(1,128)}', space=vmem, size = 0x9000, scoped, tag = 'internal scratch']
  %s0 = inlined_call_operand.vmem [shape: bf16[2,4,256], index: 0, kind: input, shape index: {}]
  %s1 = inlined_call_operand.vmem [shape: bf16[8,4], index: 1, kind: input, shape index: {}]
  %s2 = inlined_call_operand.vmem [shape: bf16[2,8,256], index: 2, kind: output, shape index: {0}]
  %s3 = inlined_call_operand.vmem [shape: f32[2,8,2], index: 3, kind: output, shape index: {1}]
  %4 = xla_tuple %s2, %s3
  %s5 = sld [smem:[#allocation0]]
  $region49: #{identity_block_forward.4} parent=0
    _
  %s7 = ssub.s32 1, %s5
  %s8 = scalar_select 0, %s7, %s5
  loop: start=0, step=1, limit=4
  $region2: #{identity_block_forward.4} parent=0 // loop_pre_header
    _
  $region3: #{identity_block_forward.4} parent=0 // loop_header
    %s10 = sphi 0, %s14
    %p11 = scmp.ge.s32.totalorder %s10, 4
    %s20 = sphi 0, %s22
    %s23 = sphi 0, %s20
    %s24 = sphi 0, %s23
    %s40 = sphi 0, %s24
    %s44 = sphi 0, %s44
    %s46 = sphi 0, %s44
    %s47 = sphi 0, %s46
    %s61 = sphi 0, %s47
    %s67 = sphi 0, %s69
    %s70 = sphi 0, %s67
    %s71 = sphi 0, %s70
    %s87 = sphi 0, %s71
    %s93 = sphi 0, %s95
    %s96 = sphi 0, %s93
    %s97 = sphi 0, %s96
    %s113 = sphi 0, %s97
  $region4: #{identity_block_forward.4} parent=0 // loop_header_branch
    %13 = sbr.rel (%p11) target = $region8
  $region5: #{identity_block_forward.4} parent=0 // loop_body
    %s15 = ssub.s32 %s10, 1
    %s16 = ssub.s32 %s10, 2
    %s17 = sadd.s32 %s10, 1
    %s18 = ssub.s32 %s10, %s17
    %p19 = scmp.eq.s32.totalorder %s18, 0
    %s21 = sadd.s32 %s20, 1
    %s22 = scalar_select %p19, %s20, %s21
    %p25 = pneg %p19
    %p26 = scmp.eq.s32.totalorder %s10, 1
    %p27 = por %p25, %p26
    %p28 = scmp.ne.s32.totalorder %s20, %s23
    %p29 = scmp.eq.s32.totalorder %s10, 0
    %p30 = por %p28, %p29
    %p31 = scmp.ne.s32.totalorder %s20, %s23
    %p32 = scmp.eq.s32.totalorder %s15, 1
    %p33 = por %p31, %p32
    %p34 = scmp.ne.s32.totalorder %s23, %s24
    %p35 = scmp.eq.s32.totalorder %s15, 0
    %p36 = por %p34, %p35
    %p37 = scmp.ne.s32.totalorder %s23, %s24
    %p38 = scmp.eq.s32.totalorder %s16, 1
    %p39 = por %p37, %p38
    %p41 = scmp.ne.s32.totalorder %s24, %s40
    %p42 = scmp.eq.s32.totalorder %s16, 0
    %p43 = por %p41, %p42
    %s45 = sadd.s32 %s44, 1
    %p48 = scmp.eq.s32.totalorder %s10, 1
    %p49 = scmp.ne.s32.totalorder %s44, %s46
    %p50 = scmp.eq.s32.totalorder %s10, 0
    %p51 = por %p49, %p50
    %p52 = scmp.ne.s32.totalorder %s44, %s46
    %p53 = scmp.eq.s32.totalorder %s15, 1
    %p54 = por %p52, %p53
    %p55 = scmp.ne.s32.totalorder %s46, %s47
    %p56 = scmp.eq.s32.totalorder %s15, 0
    %p57 = por %p55, %p56
    %p58 = scmp.ne.s32.totalorder %s46, %s47
    %p59 = scmp.eq.s32.totalorder %s16, 1
    %p60 = por %p58, %p59
    %p62 = scmp.ne.s32.totalorder %s47, %s61
    %p63 = scmp.eq.s32.totalorder %s16, 0
    %p64 = por %p62, %p63
    %s65 = ssub.s32 %s10, %s17
    %p66 = scmp.eq.s32.totalorder %s65, 0
    %s68 = sadd.s32 %s67, 1
    %s69 = scalar_select %p66, %s67, %s68
    %p72 = pneg %p66
    %p73 = scmp.eq.s32.totalorder %s10, 1
    %p74 = por %p72, %p73
    %p75 = scmp.ne.s32.totalorder %s67, %s70
    %p76 = scmp.eq.s32.totalorder %s10, 0
    %p77 = por %p75, %p76
    %p78 = scmp.ne.s32.totalorder %s67, %s70
    %p79 = scmp.eq.s32.totalorder %s15, 1
    %p80 = por %p78, %p79
    %p81 = scmp.ne.s32.totalorder %s70, %s71
    %p82 = scmp.eq.s32.totalorder %s15, 0
    %p83 = por %p81, %p82
    %p84 = scmp.ne.s32.totalorder %s70, %s71
    %p85 = scmp.eq.s32.totalorder %s16, 1
    %p86 = por %p84, %p85
    %p88 = scmp.ne.s32.totalorder %s71, %s87
    %p89 = scmp.eq.s32.totalorder %s16, 0
    %p90 = por %p88, %p89
    %s91 = ssub.s32 %s10, %s17
    %p92 = scmp.eq.s32.totalorder %s91, 0
    %s94 = sadd.s32 %s93, 1
    %s95 = scalar_select %p92, %s93, %s94
    %p98 = pneg %p92
    %p99 = scmp.eq.s32.totalorder %s10, 1
    %p100 = por %p98, %p99
    %p101 = scmp.ne.s32.totalorder %s93, %s96
    %p102 = scmp.eq.s32.totalorder %s10, 0
    %p103 = por %p101, %p102
    %p104 = scmp.ne.s32.totalorder %s93, %s96
    %p105 = scmp.eq.s32.totalorder %s15, 1
    %p106 = por %p104, %p105
    %p107 = scmp.ne.s32.totalorder %s96, %s97
    %p108 = scmp.eq.s32.totalorder %s15, 0
    %p109 = por %p107, %p108
    %p110 = scmp.ne.s32.totalorder %s96, %s97
    %p111 = scmp.eq.s32.totalorder %s16, 1
    %p112 = por %p110, %p111
    %p114 = scmp.ne.s32.totalorder %s97, %s113
    %p115 = scmp.eq.s32.totalorder %s16, 0
    %p116 = por %p114, %p115
    %p117 = scmp.le.s32.totalorder 1, %s10
    %p118 = scmp.lt.s32.totalorder %s10, 3
    %p119 = pnand %p117, %p118
    %p120 = pneg %p119
    // Predicated region
    $region9: #{identity_block_forward.4} parent=5 // pred_check
      _
    $region10: #{identity_block_forward.4} parent=5 // pred_check_branch
      %122 = sbr.rel (%p119) target = $region12
    $region11: #{identity_block_forward.4} parent=5 // pred_region
      %s123 = ssub.s32 %s10, 1
      // Predicated region
      $region13: #{identity_block_forward.4} parent=11 // pred_check
        %p124 = pneg %p57
      $region14: #{identity_block_forward.4} parent=11 // pred_check_branch
        %126 = sbr.rel (%p124) target = $region16
      $region15: #{identity_block_forward.4} parent=11 // pred_region
        _
      $region16: #{identity_block_forward.4} parent=11 // pred_fallthru
        _
    $region12: #{identity_block_forward.4} parent=5 // pred_fallthru
      _
    %p127 = scmp.lt.s32.totalorder %s10, 2
    // Predicated region
    $region17: #{identity_block_forward.4} parent=5 // pred_check
      %p128 = pneg %p127
    $region18: #{identity_block_forward.4} parent=5 // pred_check_branch
      %130 = sbr.rel (%p128) target = $region20
    $region19: #{identity_block_forward.4} parent=5 // pred_region
      // Predicated region
      $region21: #{identity_block_forward.4} parent=19 // pred_check
        %p131 = pneg %p30
      $region22: #{identity_block_forward.4} parent=19 // pred_check_branch
        %133 = sbr.rel (%p131) target = $region24
      $region23: #{identity_block_forward.4} parent=19 // pred_region
        %p134 = scmp.lt.s32.totalorder %s10, 1
        %s135 = scalar_select %p134, %s10, 1
        %s136 = smul.addr %s135, 2
        %s137 = smul.addr %s136, 2
        %s138 = scalar_lea.vmem %s0, %s137
      $region24: #{identity_block_forward.4} parent=19 // pred_fallthru
        _
    $region20: #{identity_block_forward.4} parent=5 // pred_fallthru
      _
    %p139 = scmp.le.s32.totalorder 1, %s10
    %p140 = scmp.lt.s32.totalorder %s10, 3
    %p141 = pnand %p139, %p140
    %p142 = pneg %p141
    // Predicated region
    $region25: #{identity_block_forward.4} parent=5 // pred_check
      _
    $region26: #{identity_block_forward.4} parent=5 // pred_check_branch
      %144 = sbr.rel (%p141) target = $region28
    $region27: #{identity_block_forward.4} parent=5 // pred_region
      %s145 = ssub.s32 %s10, 1
      %p146 = scmp.lt.s32.totalorder %s15, 1
      %s147 = scalar_select %p146, %s15, 1
      %s148 = smul.addr %s147, 2
      %s149 = smul.addr %s148, 2
      %s150 = scalar_lea.vmem %s0, %s149
      %p151 = pneg %p36
      %p152 = pneg %p33
      %p153 = pneg %p57
      %p154 = pneg %p54
      %p155 = pneg %p83
      %p156 = pneg %p80
      %p157 = scmp.lt.s32.totalorder %s15, 1
      %s158 = scalar_select %p157, %s15, 1
      %s159 = smul.addr %s158, 2
      %s160 = smul.addr %s159, 4
      %s161 = scalar_lea.vmem %s2, %s160
      %p162 = pneg %p109
      %p163 = pneg %p106
      %p164 = scmp.lt.s32.totalorder %s15, 1
      %s165 = scalar_select %p164, %s15, 1
      %s166 = smul.addr %s165, 8
      %s167 = scalar_lea.vmem %s3, %s166
      %p168 = scmp.lt.s32.totalorder %s15, 1
      %s169 = scalar_select %p168, %s15, 1
      %s170 = smul.addr %s169, 2
      %s171 = smul.addr %s170, 2
      %s172 = scalar_lea.vmem %s0, %s171
      %p173 = scmp.lt.s32.totalorder %s15, 1
      %s174 = scalar_select %p173, %s15, 1
      %s175 = smul.addr %s174, 2
      %s176 = smul.addr %s175, 4
      %s177 = scalar_lea.vmem %s2, %s176
      %p178 = scmp.lt.s32.totalorder %s15, 1
      %s179 = scalar_select %p178, %s15, 1
      %s180 = smul.addr %s179, 8
      %s181 = scalar_lea.vmem %s3, %s180
      %v183 = vld [vmem:[%s1] sm:$0xf]
      %v184 = vld [vmem:[%s172] sm:$0xf]
      %186 = vst [vmem:[#allocation1] ss:$4 sm:$0xff] %v184
      %v187 = vld.sshfl [vmem:[#allocation1] sm:$0xff pattern:$0x73625140]
      %v188 = vld.sshfl [vmem:[#allocation1 + $0x8] sm:$0xff pattern:$0x73625140]
      %vm189 = vcmask 31744
      %v191 = vsel %vm189, %v183, 0
      %vm193 = vcmask 1041408
      %v194 = vsel %vm193, %v187, 0
      %v196 = vsel %vm193, %v188, 0
      %198 = vmatpush.bf16.msra.mxu0 0
      %199 = vmatpush.bf16.msra.mxu0 0
      %200 = vmatpush.bf16.msra.mxu0 0
      %201 = vmatpush.bf16.msra.mxu0 0
      %202 = vmatpush.bf16.msra.mxu0 0
      %203 = vmatpush.bf16.msra.mxu0 0
      %204 = vmatpush.bf16.msra.mxu0 0
      %205 = vmatpush.bf16.msra.mxu0 %v194
      %206 = vmatmul.bf16.gmra.mxu0 %v191
      %v207 = vpop.f32.mrf.mxu0
      %v208 = vadd.f32 0.0, %v207
      %v209 = vpop.f32.mrf.mxu0
      %210 = vdwg.mxu0
      %211 = vmatpush.bf16.msra.mxu0 0
      %212 = vmatpush.bf16.msra.mxu0 0
      %213 = vmatpush.bf16.msra.mxu0 0
      %214 = vmatpush.bf16.msra.mxu0 0
      %215 = vmatpush.bf16.msra.mxu0 0
      %216 = vmatpush.bf16.msra.mxu0 0
      %217 = vmatpush.bf16.msra.mxu0 0
      %218 = vmatpush.bf16.msra.mxu0 %v196
      %219 = vmatmul.bf16.gmra.mxu0 %v191
      %v220 = vpop.f32.mrf.mxu0
      %v221 = vadd.f32 0.0, %v220
      %v222 = vpop.f32.mrf.mxu0
      %223 = vdwg.mxu0
      %v224 = vadd.f32 %v208, %v221
      %225 = vadd.xlane.f32.xlu0 %v224
      %v226 = vpop.xlane.xlu0 %225
      %v227 = vmul.f32 %v208, %v208
      %v228 = vmul.f32 %v221, %v221
      %v229 = vadd.f32 %v227, %v228
      %230 = vadd.xlane.f32.xlu0 %v229
      %v231 = vpop.xlane.xlu0 %230
      %vm232 = vcmask 7168
      %v233 = vsel %vm232, %v226, %v231
      %vm234 = vcmask 15360
      %235 = vst.msk [vmem:[%s181] sm:$0xff] %vm234, %v233
      %v236 = vpack.c.bf16 %v221, %v208
      %237 = vst [vmem:[%s177] sm:$0xff] %v236
      %p238 = scmp.lt.s32.totalorder %s15, 1
      %s239 = scalar_select %p238, %s15, 1
      %s240 = smul.addr %s239, 2
      %s241 = smul.addr %s240, 4
      %s242 = scalar_lea.vmem %s2, %s241
      %p243 = scmp.lt.s32.totalorder %s15, 1
      %s244 = scalar_select %p243, %s15, 1
      %s245 = smul.addr %s244, 8
      %s246 = scalar_lea.vmem %s3, %s245
      // Predicated region
      $region29: #{identity_block_forward.4} parent=27 // pred_check
        %p247 = pneg %p80
      $region30: #{identity_block_forward.4} parent=27 // pred_check_branch
        %249 = sbr.rel (%p247) target = $region32
      $region31: #{identity_block_forward.4} parent=27 // pred_region
        _
      $region32: #{identity_block_forward.4} parent=27 // pred_fallthru
        _
      // Predicated region
      $region33: #{identity_block_forward.4} parent=27 // pred_check
        %p250 = pneg %p106
      $region34: #{identity_block_forward.4} parent=27 // pred_check_branch
        %252 = sbr.rel (%p250) target = $region36
      $region35: #{identity_block_forward.4} parent=27 // pred_region
        _
      $region36: #{identity_block_forward.4} parent=27 // pred_fallthru
        _
    $region28: #{identity_block_forward.4} parent=5 // pred_fallthru
      _
    %p253 = scmp.le.s32.totalorder 2, %s10
    // Predicated region
    $region37: #{identity_block_forward.4} parent=5 // pred_check
      %p254 = pneg %p253
    $region38: #{identity_block_forward.4} parent=5 // pred_check_branch
      %256 = sbr.rel (%p254) target = $region40
    $region39: #{identity_block_forward.4} parent=5 // pred_region
      %s257 = ssub.s32 %s10, 2
      // Predicated region
      $region41: #{identity_block_forward.4} parent=39 // pred_check
        %p258 = pneg %p86
      $region42: #{identity_block_forward.4} parent=39 // pred_check_branch
        %260 = sbr.rel (%p258) target = $region44
      $region43: #{identity_block_forward.4} parent=39 // pred_region
        %p261 = scmp.lt.s32.totalorder %s16, 1
        %s262 = scalar_select %p261, %s16, 1
        %s263 = smul.addr %s262, 2
        %s264 = smul.addr %s263, 4
        %s265 = scalar_lea.vmem %s2, %s264
      $region44: #{identity_block_forward.4} parent=39 // pred_fallthru
        _
      // Predicated region
      $region45: #{identity_block_forward.4} parent=39 // pred_check
        %p266 = pneg %p112
      $region46: #{identity_block_forward.4} parent=39 // pred_check_branch
        %268 = sbr.rel (%p266) target = $region48
      $region47: #{identity_block_forward.4} parent=39 // pred_region
        %p269 = scmp.lt.s32.totalorder %s16, 1
        %s270 = scalar_select %p269, %s16, 1
        %s271 = smul.addr %s270, 8
        %s272 = scalar_lea.vmem %s3, %s271
      $region48: #{identity_block_forward.4} parent=39 // pred_fallthru
        _
    $region40: #{identity_block_forward.4} parent=5 // pred_fallthru
      _
  $region6: #{identity_block_forward.4} parent=0 // loop_footer
    %s14 = sadd.s32 1, %s10
  $region7: #{identity_block_forward.4} parent=0 // loop_footer_branch
    %9 = sbr.rel target = $region3
  $region8: #{identity_block_forward.4} parent=0 // loop_exit
    _

// kernel: identity_block_forward.6
$region0: #{identity_block_forward.6}
  #allocation0 [shape = 'u32[]', space=smem, size = 0x4, offset = 0x4, fixed_abs, tag = 'smem constant byte address 0x4 - core index']
  #allocation1 [shape = 'u32[72,128]{1,0:T(1,128)}', space=vmem, size = 0x9000, scoped, tag = 'internal scratch']
  %s0 = inlined_call_operand.vmem [shape: bf16[2,8,256], index: 0, kind: input, shape index: {}]
  %s1 = inlined_call_operand.vmem [shape: f32[8,1], index: 1, kind: input, shape index: {}]
  %s2 = inlined_call_operand.vmem [shape: f32[8,1], index: 2, kind: input, shape index: {}]
  %s3 = inlined_call_operand.vmem [shape: bf16[4,8], index: 3, kind: input, shape index: {}]
  %s4 = inlined_call_operand.vmem [shape: f32[2,4,2], index: 4, kind: output, shape index: {}]
  %s5 = sld [smem:[#allocation0]]
  $region49: #{identity_block_forward.6} parent=0
    _
  %s7 = ssub.s32 1, %s5
  %s8 = scalar_select 0, %s7, %s5
  loop: start=0, step=1, limit=4
  $region2: #{identity_block_forward.6} parent=0 // loop_pre_header
    _
  $region3: #{identity_block_forward.6} parent=0 // loop_header
    %s10 = sphi 0, %s14
    %p11 = scmp.ge.s32.totalorder %s10, 4
    %s20 = sphi 0, %s22
    %s23 = sphi 0, %s20
    %s24 = sphi 0, %s23
    %s40 = sphi 0, %s24
    %s44 = sphi 0, %s44
    %s46 = sphi 0, %s44
    %s47 = sphi 0, %s46
    %s61 = sphi 0, %s47
    %s65 = sphi 0, %s65
    %s67 = sphi 0, %s65
    %s68 = sphi 0, %s67
    %s82 = sphi 0, %s68
    %s86 = sphi 0, %s86
    %s88 = sphi 0, %s86
    %s89 = sphi 0, %s88
    %s103 = sphi 0, %s89
    %s109 = sphi 0, %s111
    %s112 = sphi 0, %s109
    %s113 = sphi 0, %s112
    %s129 = sphi 0, %s113
  $region4: #{identity_block_forward.6} parent=0 // loop_header_branch
    %13 = sbr.rel (%p11) target = $region8
  $region5: #{identity_block_forward.6} parent=0 // loop_body
    %s15 = ssub.s32 %s10, 1
    %s16 = ssub.s32 %s10, 2
    %s17 = sadd.s32 %s10, 1
    %s18 = ssub.s32 %s10, %s17
    %p19 = scmp.eq.s32.totalorder %s18, 0
    %s21 = sadd.s32 %s20, 1
    %s22 = scalar_select %p19, %s20, %s21
    %p25 = pneg %p19
    %p26 = scmp.eq.s32.totalorder %s10, 1
    %p27 = por %p25, %p26
    %p28 = scmp.ne.s32.totalorder %s20, %s23
    %p29 = scmp.eq.s32.totalorder %s10, 0
    %p30 = por %p28, %p29
    %p31 = scmp.ne.s32.totalorder %s20, %s23
    %p32 = scmp.eq.s32.totalorder %s15, 1
    %p33 = por %p31, %p32
    %p34 = scmp.ne.s32.totalorder %s23, %s24
    %p35 = scmp.eq.s32.totalorder %s15, 0
    %p36 = por %p34, %p35
    %p37 = scmp.ne.s32.totalorder %s23, %s24
    %p38 = scmp.eq.s32.totalorder %s16, 1
    %p39 = por %p37, %p38
    %p41 = scmp.ne.s32.totalorder %s24, %s40
    %p42 = scmp.eq.s32.totalorder %s16, 0
    %p43 = por %p41, %p42
    %s45 = sadd.s32 %s44, 1
    %p48 = scmp.eq.s32.totalorder %s10, 1
    %p49 = scmp.ne.s32.totalorder %s44, %s46
    %p50 = scmp.eq.s32.totalorder %s10, 0
    %p51 = por %p49, %p50
    %p52 = scmp.ne.s32.totalorder %s44, %s46
    %p53 = scmp.eq.s32.totalorder %s15, 1
    %p54 = por %p52, %p53
    %p55 = scmp.ne.s32.totalorder %s46, %s47
    %p56 = scmp.eq.s32.totalorder %s15, 0
    %p57 = por %p55, %p56
    %p58 = scmp.ne.s32.totalorder %s46, %s47
    %p59 = scmp.eq.s32.totalorder %s16, 1
    %p60 = por %p58, %p59
    %p62 = scmp.ne.s32.totalorder %s47, %s61
    %p63 = scmp.eq.s32.totalorder %s16, 0
    %p64 = por %p62, %p63
    %s66 = sadd.s32 %s65, 1
    %p69 = scmp.eq.s32.totalorder %s10, 1
    %p70 = scmp.ne.s32.totalorder %s65, %s67
    %p71 = scmp.eq.s32.totalorder %s10, 0
    %p72 = por %p70, %p71
    %p73 = scmp.ne.s32.totalorder %s65, %s67
    %p74 = scmp.eq.s32.totalorder %s15, 1
    %p75 = por %p73, %p74
    %p76 = scmp.ne.s32.totalorder %s67, %s68
    %p77 = scmp.eq.s32.totalorder %s15, 0
    %p78 = por %p76, %p77
    %p79 = scmp.ne.s32.totalorder %s67, %s68
    %p80 = scmp.eq.s32.totalorder %s16, 1
    %p81 = por %p79, %p80
    %p83 = scmp.ne.s32.totalorder %s68, %s82
    %p84 = scmp.eq.s32.totalorder %s16, 0
    %p85 = por %p83, %p84
    %s87 = sadd.s32 %s86, 1
    %p90 = scmp.eq.s32.totalorder %s10, 1
    %p91 = scmp.ne.s32.totalorder %s86, %s88
    %p92 = scmp.eq.s32.totalorder %s10, 0
    %p93 = por %p91, %p92
    %p94 = scmp.ne.s32.totalorder %s86, %s88
    %p95 = scmp.eq.s32.totalorder %s15, 1
    %p96 = por %p94, %p95
    %p97 = scmp.ne.s32.totalorder %s88, %s89
    %p98 = scmp.eq.s32.totalorder %s15, 0
    %p99 = por %p97, %p98
    %p100 = scmp.ne.s32.totalorder %s88, %s89
    %p101 = scmp.eq.s32.totalorder %s16, 1
    %p102 = por %p100, %p101
    %p104 = scmp.ne.s32.totalorder %s89, %s103
    %p105 = scmp.eq.s32.totalorder %s16, 0
    %p106 = por %p104, %p105
    %s107 = ssub.s32 %s10, %s17
    %p108 = scmp.eq.s32.totalorder %s107, 0
    %s110 = sadd.s32 %s109, 1
    %s111 = scalar_select %p108, %s109, %s110
    %p114 = pneg %p108
    %p115 = scmp.eq.s32.totalorder %s10, 1
    %p116 = por %p114, %p115
    %p117 = scmp.ne.s32.totalorder %s109, %s112
    %p118 = scmp.eq.s32.totalorder %s10, 0
    %p119 = por %p117, %p118
    %p120 = scmp.ne.s32.totalorder %s109, %s112
    %p121 = scmp.eq.s32.totalorder %s15, 1
    %p122 = por %p120, %p121
    %p123 = scmp.ne.s32.totalorder %s112, %s113
    %p124 = scmp.eq.s32.totalorder %s15, 0
    %p125 = por %p123, %p124
    %p126 = scmp.ne.s32.totalorder %s112, %s113
    %p127 = scmp.eq.s32.totalorder %s16, 1
    %p128 = por %p126, %p127
    %p130 = scmp.ne.s32.totalorder %s113, %s129
    %p131 = scmp.eq.s32.totalorder %s16, 0
    %p132 = por %p130, %p131
    %p133 = scmp.le.s32.totalorder 1, %s10
    %p134 = scmp.lt.s32.totalorder %s10, 3
    %p135 = pnand %p133, %p134
    %p136 = pneg %p135
    // Predicated region
    $region9: #{identity_block_forward.6} parent=5 // pred_check
      _
    $region10: #{identity_block_forward.6} parent=5 // pred_check_branch
      %138 = sbr.rel (%p135) target = $region12
    $region11: #{identity_block_forward.6} parent=5 // pred_region
      %s139 = ssub.s32 %s10, 1
      // Predicated region
      $region13: #{identity_block_forward.6} parent=11 // pred_check
        %p140 = pneg %p57
      $region14: #{identity_block_forward.6} parent=11 // pred_check_branch
        %142 = sbr.rel (%p140) target = $region16
      $region15: #{identity_block_forward.6} parent=11 // pred_region
        _
      $region16: #{identity_block_forward.6} parent=11 // pred_fallthru
        _
      // Predicated region
      $region17: #{identity_block_forward.6} parent=11 // pred_check
        %p143 = pneg %p78
      $region18: #{identity_block_forward.6} parent=11 // pred_check_branch
        %145 = sbr.rel (%p143) target = $region20
      $region19: #{identity_block_forward.6} parent=11 // pred_region
        _
      $region20: #{identity_block_forward.6} parent=11 // pred_fallthru
        _
      // Predicated region
      $region21: #{identity_block_forward.6} parent=11 // pred_check
        %p146 = pneg %p99
      $region22: #{identity_block_forward.6} parent=11 // pred_check_branch
        %148 = sbr.rel (%p146) target = $region24
      $region23: #{identity_block_forward.6} parent=11 // pred_region
        _
      $region24: #{identity_block_forward.6} parent=11 // pred_fallthru
        _
    $region12: #{identity_block_forward.6} parent=5 // pred_fallthru
      _
    %p149 = scmp.lt.s32.totalorder %s10, 2
    // Predicated region
    $region25: #{identity_block_forward.6} parent=5 // pred_check
      %p150 = pneg %p149
    $region26: #{identity_block_forward.6} parent=5 // pred_check_branch
      %152 = sbr.rel (%p150) target = $region28
    $region27: #{identity_block_forward.6} parent=5 // pred_region
      // Predicated region
      $region29: #{identity_block_forward.6} parent=27 // pred_check
        %p153 = pneg %p30
      $region30: #{identity_block_forward.6} parent=27 // pred_check_branch
        %155 = sbr.rel (%p153) target = $region32
      $region31: #{identity_block_forward.6} parent=27 // pred_region
        %p156 = scmp.lt.s32.totalorder %s10, 1
        %s157 = scalar_select %p156, %s10, 1
        %s158 = smul.addr %s157, 2
        %s159 = smul.addr %s158, 4
        %s160 = scalar_lea.vmem %s0, %s159
      $region32: #{identity_block_forward.6} parent=27 // pred_fallthru
        _
    $region28: #{identity_block_forward.6} parent=5 // pred_fallthru
      _
    %p161 = scmp.le.s32.totalorder 1, %s10
    %p162 = scmp.lt.s32.totalorder %s10, 3
    %p163 = pnand %p161, %p162
    %p164 = pneg %p163
    // Predicated region
    $region33: #{identity_block_forward.6} parent=5 // pred_check
      _
    $region34: #{identity_block_forward.6} parent=5 // pred_check_branch
      %166 = sbr.rel (%p163) target = $region36
    $region35: #{identity_block_forward.6} parent=5 // pred_region
      %s167 = ssub.s32 %s10, 1
      %p168 = scmp.lt.s32.totalorder %s15, 1
      %s169 = scalar_select %p168, %s15, 1
      %s170 = smul.addr %s169, 2
      %s171 = smul.addr %s170, 4
      %s172 = scalar_lea.vmem %s0, %s171
      %p173 = pneg %p36
      %p174 = pneg %p33
      %p175 = pneg %p57
      %p176 = pneg %p54
      %p177 = pneg %p78
      %p178 = pneg %p75
      %p179 = pneg %p99
      %p180 = pneg %p96
      %p181 = pneg %p125
      %p182 = pneg %p122
      %p183 = scmp.lt.s32.totalorder %s15, 1
      %s184 = scalar_select %p183, %s15, 1
      %s185 = smul.addr %s184, 4
      %s186 = scalar_lea.vmem %s4, %s185
      %p187 = scmp.lt.s32.totalorder %s15, 1
      %s188 = scalar_select %p187, %s15, 1
      %s189 = smul.addr %s188, 2
      %s190 = smul.addr %s189, 4
      %s191 = scalar_lea.vmem %s0, %s190
      %p192 = scmp.lt.s32.totalorder %s15, 1
      %s193 = scalar_select %p192, %s15, 1
      %s194 = smul.addr %s193, 4
      %s195 = scalar_lea.vmem %s4, %s194
      %v197 = vld [vmem:[%s191] sm:$0xff]
      %v198 = vld [vmem:[%s1] sm:$0xff]
      %v199 = vld [vmem:[%s2] sm:$0xff]
      %v200 = vld [vmem:[%s3] sm:$0x3]
      %v201 = vunpack.c.l.bf16 %v197
      %v202 = vunpack.c.h.bf16 %v197
      %204 = vset.pattern.permute.xlu0 0
      %205 = vperm.xlu0 %204, %v198
      %v206 = vpop.permute.xlu0 %205
      %v208 = vmul.f32 %v201, %v206
      %v209 = vmul.f32 %v202, %v206
      %211 = vset.pattern.permute.xlu0 0
      %212 = vperm.xlu0 %211, %v199
      %v213 = vpop.permute.xlu0 %212
      %v215 = vadd.f32 %v208, %v213
      %v216 = vadd.f32 %v209, %v213
      %v217 = vmax.f32 %v215, 0.0
      %v218 = vmax.f32 %v216, 0.0
      %v219 = vpack.c.bf16 %v217, %v217
      %v220 = vpack.c.bf16 %v218, %v218
      %vm221 = vcmask 64512
      %v223 = vsel %vm221, %v200, 0
      %vm225 = vcmask 1043456
      %v227 = vsel %vm225, %v219, 0
      %v230 = vsel %vm225, %v220, 0
      %232 = vmatpush.bf16.msra.mxu0 0
      %233 = vmatpush.bf16.msra.mxu0 0
      %234 = vmatpush.bf16.msra.mxu0 0
      %235 = vmatpush.bf16.msra.mxu0 0
      %236 = vmatpush.bf16.msra.mxu0 0
      %237 = vmatpush.bf16.msra.mxu0 0
      %238 = vmatpush.bf16.msra.mxu0 0
      %239 = vmatpush.bf16.msra.mxu0 %v227
      %240 = vmatmul.bf16.gmra.mxu0 %v223
      %v241 = vpop.f32.mrf.mxu0
      %v242 = vadd.f32 0.0, %v241
      %v243 = vpop.f32.mrf.mxu0
      %244 = vdwg.mxu0
      %245 = vmatpush.bf16.msra.mxu0 0
      %246 = vmatpush.bf16.msra.mxu0 0
      %247 = vmatpush.bf16.msra.mxu0 0
      %248 = vmatpush.bf16.msra.mxu0 0
      %249 = vmatpush.bf16.msra.mxu0 0
      %250 = vmatpush.bf16.msra.mxu0 0
      %251 = vmatpush.bf16.msra.mxu0 0
      %252 = vmatpush.bf16.msra.mxu0 %v230
      %253 = vmatmul.bf16.gmra.mxu0 %v223
      %v254 = vpop.f32.mrf.mxu0
      %v255 = vadd.f32 0.0, %v254
      %v256 = vpop.f32.mrf.mxu0
      %257 = vdwg.mxu0
      %v258 = vsel %vm225, %v242, 0.0
      %v259 = vsel %vm225, %v255, 0.0
      %v260 = vadd.f32 %v258, %v259
      %261 = vadd.xlane.f32.xlu0 %v260
      %v262 = vpop.xlane.xlu0 %261
      %v263 = vmul.f32 %v242, %v242
      %v264 = vmul.f32 %v255, %v255
      %v265 = vsel %vm225, %v263, 0.0
      %v266 = vsel %vm225, %v264, 0.0
      %v267 = vadd.f32 %v265, %v266
      %268 = vadd.xlane.f32.xlu0 %v267
      %v269 = vpop.xlane.xlu0 %268
      %vm270 = vcmask 7168
      %v271 = vsel %vm270, %v262, %v269
      %vm272 = vcmask 11264
      %273 = vst.msk [vmem:[%s195] sm:$0xf] %vm272, %v271
      %p274 = scmp.lt.s32.totalorder %s15, 1
      %s275 = scalar_select %p274, %s15, 1
      %s276 = smul.addr %s275, 4
      %s277 = scalar_lea.vmem %s4, %s276
      // Predicated region
      $region37: #{identity_block_forward.6} parent=35 // pred_check
        %p278 = pneg %p122
      $region38: #{identity_block_forward.6} parent=35 // pred_check_branch
        %280 = sbr.rel (%p278) target = $region40
      $region39: #{identity_block_forward.6} parent=35 // pred_region
        _
      $region40: #{identity_block_forward.6} parent=35 // pred_fallthru
        _
    $region36: #{identity_block_forward.6} parent=5 // pred_fallthru
      _
    %p281 = scmp.le.s32.totalorder 2, %s10
    // Predicated region
    $region41: #{identity_block_forward.6} parent=5 // pred_check
      %p282 = pneg %p281
    $region42: #{identity_block_forward.6} parent=5 // pred_check_branch
      %284 = sbr.rel (%p282) target = $region44
    $region43: #{identity_block_forward.6} parent=5 // pred_region
      %s285 = ssub.s32 %s10, 2
      // Predicated region
      $region45: #{identity_block_forward.6} parent=43 // pred_check
        %p286 = pneg %p128
      $region46: #{identity_block_forward.6} parent=43 // pred_check_branch
        %288 = sbr.rel (%p286) target = $region48
      $region47: #{identity_block_forward.6} parent=43 // pred_region
        %p289 = scmp.lt.s32.totalorder %s16, 1
        %s290 = scalar_select %p289, %s16, 1
        %s291 = smul.addr %s290, 4
        %s292 = scalar_lea.vmem %s4, %s291
      $region48: #{identity_block_forward.6} parent=43 // pred_fallthru
        _
    $region44: #{identity_block_forward.6} parent=5 // pred_fallthru
      _
  $region6: #{identity_block_forward.6} parent=0 // loop_footer
    %s14 = sadd.s32 1, %s10
  $region7: #{identity_block_forward.6} parent=0 // loop_footer_branch
    %9 = sbr.rel target = $region3
  $region8: #{identity_block_forward.6} parent=0 // loop_exit
    _

// kernel: identity_block_forward.5
$region0: #{identity_block_forward.5}
  #allocation0 [shape = 'u32[]', space=smem, size = 0x4, offset = 0x4, fixed_abs, tag = 'smem constant byte address 0x4 - core index']
  #allocation1 [shape = 'u32[72,128]{1,0:T(1,128)}', space=vmem, size = 0x9000, scoped, tag = 'internal scratch']
  %s0 = inlined_call_operand.vmem [shape: bf16[2,8,256], index: 0, kind: input, shape index: {}]
  %s1 = inlined_call_operand.vmem [shape: f32[8,1], index: 1, kind: input, shape index: {}]
  %s2 = inlined_call_operand.vmem [shape: f32[8,1], index: 2, kind: input, shape index: {}]
  %s3 = inlined_call_operand.vmem [shape: bf16[8,72], index: 3, kind: input, shape index: {}]
  %s4 = inlined_call_operand.vmem [shape: bf16[2,8,256], index: 4, kind: output, shape index: {0}]
  %s5 = inlined_call_operand.vmem [shape: f32[2,8,2], index: 5, kind: output, shape index: {1}]
  %6 = xla_tuple %s4, %s5
  %s7 = sld [smem:[#allocation0]]
  $region57: #{identity_block_forward.5} parent=0
    _
  %s9 = ssub.s32 1, %s7
  %s10 = scalar_select 0, %s9, %s7
  loop: start=0, step=1, limit=4
  $region2: #{identity_block_forward.5} parent=0 // loop_pre_header
    _
  $region3: #{identity_block_forward.5} parent=0 // loop_header
    %s12 = sphi 0, %s16
    %p13 = scmp.ge.s32.totalorder %s12, 4
    %s22 = sphi 0, %s24
    %s25 = sphi 0, %s22
    %s26 = sphi 0, %s25
    %s42 = sphi 0, %s26
    %s46 = sphi 0, %s46
    %s48 = sphi 0, %s46
    %s49 = sphi 0, %s48
    %s63 = sphi 0, %s49
    %s67 = sphi 0, %s67
    %s69 = sphi 0, %s67
    %s70 = sphi 0, %s69
    %s84 = sphi 0, %s70
    %s88 = sphi 0, %s88
    %s90 = sphi 0, %s88
    %s91 = sphi 0, %s90
    %s105 = sphi 0, %s91
    %s111 = sphi 0, %s113
    %s114 = sphi 0, %s111
    %s115 = sphi 0, %s114
    %s131 = sphi 0, %s115
    %s137 = sphi 0, %s139
    %s140 = sphi 0, %s137
    %s141 = sphi 0, %s140
    %s157 = sphi 0, %s141
  $region4: #{identity_block_forward.5} parent=0 // loop_header_branch
    %15 = sbr.rel (%p13) target = $region8
  $region5: #{identity_block_forward.5} parent=0 // loop_body
    %s17 = ssub.s32 %s12, 1
    %s18 = ssub.s32 %s12, 2
    %s19 = sadd.s32 %s12, 1
    %s20 = ssub.s32 %s12, %s19
    %p21 = scmp.eq.s32.totalorder %s20, 0
    %s23 = sadd.s32 %s22, 1
    %s24 = scalar_select %p21, %s22, %s23
    %p27 = pneg %p21
    %p28 = scmp.eq.s32.totalorder %s12, 1
    %p29 = por %p27, %p28
    %p30 = scmp.ne.s32.totalorder %s22, %s25
    %p31 = scmp.eq.s32.totalorder %s12, 0
    %p32 = por %p30, %p31
    %p33 = scmp.ne.s32.totalorder %s22, %s25
    %p34 = scmp.eq.s32.totalorder %s17, 1
    %p35 = por %p33, %p34
    %p36 = scmp.ne.s32.totalorder %s25, %s26
    %p37 = scmp.eq.s32.totalorder %s17, 0
    %p38 = por %p36, %p37
    %p39 = scmp.ne.s32.totalorder %s25, %s26
    %p40 = scmp.eq.s32.totalorder %s18, 1
    %p41 = por %p39, %p40
    %p43 = scmp.ne.s32.totalorder %s26, %s42
    %p44 = scmp.eq.s32.totalorder %s18, 0
    %p45 = por %p43, %p44
    %s47 = sadd.s32 %s46, 1
    %p50 = scmp.eq.s32.totalorder %s12, 1
    %p51 = scmp.ne.s32.totalorder %s46, %s48
    %p52 = scmp.eq.s32.totalorder %s12, 0
    %p53 = por %p51, %p52
    %p54 = scmp.ne.s32.totalorder %s46, %s48
    %p55 = scmp.eq.s32.totalorder %s17, 1
    %p56 = por %p54, %p55
    %p57 = scmp.ne.s32.totalorder %s48, %s49
    %p58 = scmp.eq.s32.totalorder %s17, 0
    %p59 = por %p57, %p58
    %p60 = scmp.ne.s32.totalorder %s48, %s49
    %p61 = scmp.eq.s32.totalorder %s18, 1
    %p62 = por %p60, %p61
    %p64 = scmp.ne.s32.totalorder %s49, %s63
    %p65 = scmp.eq.s32.totalorder %s18, 0
    %p66 = por %p64, %p65
    %s68 = sadd.s32 %s67, 1
    %p71 = scmp.eq.s32.totalorder %s12, 1
    %p72 = scmp.ne.s32.totalorder %s67, %s69
    %p73 = scmp.eq.s32.totalorder %s12, 0
    %p74 = por %p72, %p73
    %p75 = scmp.ne.s32.totalorder %s67, %s69
    %p76 = scmp.eq.s32.totalorder %s17, 1
    %p77 = por %p75, %p76
    %p78 = scmp.ne.s32.totalorder %s69, %s70
    %p79 = scmp.eq.s32.totalorder %s17, 0
    %p80 = por %p78, %p79
    %p81 = scmp.ne.s32.totalorder %s69, %s70
    %p82 = scmp.eq.s32.totalorder %s18, 1
    %p83 = por %p81, %p82
    %p85 = scmp.ne.s32.totalorder %s70, %s84
    %p86 = scmp.eq.s32.totalorder %s18, 0
    %p87 = por %p85, %p86
    %s89 = sadd.s32 %s88, 1
    %p92 = scmp.eq.s32.totalorder %s12, 1
    %p93 = scmp.ne.s32.totalorder %s88, %s90
    %p94 = scmp.eq.s32.totalorder %s12, 0
    %p95 = por %p93, %p94
    %p96 = scmp.ne.s32.totalorder %s88, %s90
    %p97 = scmp.eq.s32.totalorder %s17, 1
    %p98 = por %p96, %p97
    %p99 = scmp.ne.s32.totalorder %s90, %s91
    %p100 = scmp.eq.s32.totalorder %s17, 0
    %p101 = por %p99, %p100
    %p102 = scmp.ne.s32.totalorder %s90, %s91
    %p103 = scmp.eq.s32.totalorder %s18, 1
    %p104 = por %p102, %p103
    %p106 = scmp.ne.s32.totalorder %s91, %s105
    %p107 = scmp.eq.s32.totalorder %s18, 0
    %p108 = por %p106, %p107
    %s109 = ssub.s32 %s12, %s19
    %p110 = scmp.eq.s32.totalorder %s109, 0
    %s112 = sadd.s32 %s111, 1
    %s113 = scalar_select %p110, %s111, %s112
    %p116 = pneg %p110
    %p117 = scmp.eq.s32.totalorder %s12, 1
    %p118 = por %p116, %p117
    %p119 = scmp.ne.s32.totalorder %s111, %s114
    %p120 = scmp.eq.s32.totalorder %s12, 0
    %p121 = por %p119, %p120
    %p122 = scmp.ne.s32.totalorder %s111, %s114
    %p123 = scmp.eq.s32.totalorder %s17, 1
    %p124 = por %p122, %p123
    %p125 = scmp.ne.s32.totalorder %s114, %s115
    %p126 = scmp.eq.s32.totalorder %s17, 0
    %p127 = por %p125, %p126
    %p128 = scmp.ne.s32.totalorder %s114, %s115
    %p129 = scmp.eq.s32.totalorder %s18, 1
    %p130 = por %p128, %p129
    %p132 = scmp.ne.s32.totalorder %s115, %s131
    %p133 = scmp.eq.s32.totalorder %s18, 0
    %p134 = por %p132, %p133
    %s135 = ssub.s32 %s12, %s19
    %p136 = scmp.eq.s32.totalorder %s135, 0
    %s138 = sadd.s32 %s137, 1
    %s139 = scalar_select %p136, %s137, %s138
    %p142 = pneg %p136
    %p143 = scmp.eq.s32.totalorder %s12, 1
    %p144 = por %p142, %p143
    %p145 = scmp.ne.s32.totalorder %s137, %s140
    %p146 = scmp.eq.s32.totalorder %s12, 0
    %p147 = por %p145, %p146
    %p148 = scmp.ne.s32.totalorder %s137, %s140
    %p149 = scmp.eq.s32.totalorder %s17, 1
    %p150 = por %p148, %p149
    %p151 = scmp.ne.s32.totalorder %s140, %s141
    %p152 = scmp.eq.s32.totalorder %s17, 0
    %p153 = por %p151, %p152
    %p154 = scmp.ne.s32.totalorder %s140, %s141
    %p155 = scmp.eq.s32.totalorder %s18, 1
    %p156 = por %p154, %p155
    %p158 = scmp.ne.s32.totalorder %s141, %s157
    %p159 = scmp.eq.s32.totalorder %s18, 0
    %p160 = por %p158, %p159
    %p161 = scmp.le.s32.totalorder 1, %s12
    %p162 = scmp.lt.s32.totalorder %s12, 3
    %p163 = pnand %p161, %p162
    %p164 = pneg %p163
    // Predicated region
    $region9: #{identity_block_forward.5} parent=5 // pred_check
      _
    $region10: #{identity_block_forward.5} parent=5 // pred_check_branch
      %166 = sbr.rel (%p163) target = $region12
    $region11: #{identity_block_forward.5} parent=5 // pred_region
      %s167 = ssub.s32 %s12, 1
      // Predicated region
      $region13: #{identity_block_forward.5} parent=11 // pred_check
        %p168 = pneg %p59
      $region14: #{identity_block_forward.5} parent=11 // pred_check_branch
        %170 = sbr.rel (%p168) target = $region16
      $region15: #{identity_block_forward.5} parent=11 // pred_region
        _
      $region16: #{identity_block_forward.5} parent=11 // pred_fallthru
        _
      // Predicated region
      $region17: #{identity_block_forward.5} parent=11 // pred_check
        %p171 = pneg %p80
      $region18: #{identity_block_forward.5} parent=11 // pred_check_branch
        %173 = sbr.rel (%p171) target = $region20
      $region19: #{identity_block_forward.5} parent=11 // pred_region
        _
      $region20: #{identity_block_forward.5} parent=11 // pred_fallthru
        _
      // Predicated region
      $region21: #{identity_block_forward.5} parent=11 // pred_check
        %p174 = pneg %p101
      $region22: #{identity_block_forward.5} parent=11 // pred_check_branch
        %176 = sbr.rel (%p174) target = $region24
      $region23: #{identity_block_forward.5} parent=11 // pred_region
        _
      $region24: #{identity_block_forward.5} parent=11 // pred_fallthru
        _
    $region12: #{identity_block_forward.5} parent=5 // pred_fallthru
      _
    %p177 = scmp.lt.s32.totalorder %s12, 2
    // Predicated region
    $region25: #{identity_block_forward.5} parent=5 // pred_check
      %p178 = pneg %p177
    $region26: #{identity_block_forward.5} parent=5 // pred_check_branch
      %180 = sbr.rel (%p178) target = $region28
    $region27: #{identity_block_forward.5} parent=5 // pred_region
      // Predicated region
      $region29: #{identity_block_forward.5} parent=27 // pred_check
        %p181 = pneg %p32
      $region30: #{identity_block_forward.5} parent=27 // pred_check_branch
        %183 = sbr.rel (%p181) target = $region32
      $region31: #{identity_block_forward.5} parent=27 // pred_region
        %p184 = scmp.lt.s32.totalorder %s12, 1
        %s185 = scalar_select %p184, %s12, 1
        %s186 = smul.addr %s185, 2
        %s187 = smul.addr %s186, 4
        %s188 = scalar_lea.vmem %s0, %s187
      $region32: #{identity_block_forward.5} parent=27 // pred_fallthru
        _
    $region28: #{identity_block_forward.5} parent=5 // pred_fallthru
      _
    %p189 = scmp.le.s32.totalorder 1, %s12
    %p190 = scmp.lt.s32.totalorder %s12, 3
    %p191 = pnand %p189, %p190
    %p192 = pneg %p191
    // Predicated region
    $region33: #{identity_block_forward.5} parent=5 // pred_check
      _
    $region34: #{identity_block_forward.5} parent=5 // pred_check_branch
      %194 = sbr.rel (%p191) target = $region36
    $region35: #{identity_block_forward.5} parent=5 // pred_region
      %s195 = ssub.s32 %s12, 1
      %p196 = scmp.lt.s32.totalorder %s17, 1
      %s197 = scalar_select %p196, %s17, 1
      %s198 = smul.addr %s197, 2
      %s199 = smul.addr %s198, 4
      %s200 = scalar_lea.vmem %s0, %s199
      %p201 = pneg %p38
      %p202 = pneg %p35
      %p203 = pneg %p59
      %p204 = pneg %p56
      %p205 = pneg %p80
      %p206 = pneg %p77
      %p207 = pneg %p101
      %p208 = pneg %p98
      %p209 = pneg %p127
      %p210 = pneg %p124
      %p211 = scmp.lt.s32.totalorder %s17, 1
      %s212 = scalar_select %p211, %s17, 1
      %s213 = smul.addr %s212, 2
      %s214 = smul.addr %s213, 4
      %s215 = scalar_lea.vmem %s4, %s214
      %p216 = pneg %p153
      %p217 = pneg %p150
      %p218 = scmp.lt.s32.totalorder %s17, 1
      %s219 = scalar_select %p218, %s17, 1
      %s220 = smul.addr %s219, 8
      %s221 = scalar_lea.vmem %s5, %s220
      %p222 = scmp.lt.s32.totalorder %s17, 1
      %s223 = scalar_select %p222, %s17, 1
      %s224 = smul.addr %s223, 2
      %s225 = smul.addr %s224, 4
      %s226 = scalar_lea.vmem %s0, %s225
      %p227 = scmp.lt.s32.totalorder %s17, 1
      %s228 = scalar_select %p227, %s17, 1
      %s229 = smul.addr %s228, 2
      %s230 = smul.addr %s229, 4
      %s231 = scalar_lea.vmem %s4, %s230
      %p232 = scmp.lt.s32.totalorder %s17, 1
      %s233 = scalar_select %p232, %s17, 1
      %s234 = smul.addr %s233, 8
      %s235 = scalar_lea.vmem %s5, %s234
      %v237 = vld [vmem:[%s226] sm:$0xff]
      %v238 = vld [vmem:[%s1] sm:$0xff]
      %v239 = vunpack.c.l.bf16 %v237
      %v240 = vunpack.c.h.bf16 %v237
      %242 = vset.pattern.permute.xlu0 0
      %243 = vperm.xlu0 %242, %v238
      %v244 = vpop.permute.xlu0 %243
      %v246 = vmul.f32 %v239, %v244
      %v247 = vmul.f32 %v240, %v244
      %v248 = vld [vmem:[%s2] sm:$0xff]
      %250 = vset.pattern.permute.xlu0 0
      %251 = vperm.xlu0 %250, %v248
      %v252 = vpop.permute.xlu0 %251
      %v254 = vadd.f32 %v246, %v252
      %v255 = vadd.f32 %v247, %v252
      %v256 = vmax.f32 %v254, 0.0
      %v257 = vmax.f32 %v255, 0.0
      %v258 = vpack.c.bf16 %v257, %v256
      %v259 = vlaneseq
      %v260 = vand.u32 %v259, 127
      %v261 = vadd.s32 %v260, 128
      %vm262 = vcmp.lt.s32.totalorder %v260, 0
      %v263 = vsub.s32 0, %v260
      %v264 = vsel %vm262, %v263, %v260
      %v265 = vshrl.u32 %v264, 4
      %v266 = vand.u32 %v264, 15
      %v267 = vsub.s32 0, %v266
      %v268 = vsel %vm262, %v267, %v266
      %vm269 = vcmp.lt.s32.totalorder %v261, 0
      %v270 = vsub.s32 0, %v261
      %v271 = vsel %vm269, %v270, %v261
      %v272 = vshrl.u32 %v271, 4
      %v273 = vand.u32 %v271, 15
      %v274 = vsub.s32 0, %v273
      %v275 = vsel %vm269, %v274, %v273
      %vm276 = vcmp.ne.s32.totalorder %v268, 0
      %vm277 = vcmp.ne.s32.totalorder %v275, 0
      %vm278 = vcmp.lt.s32.totalorder %v268, 0
      %vm279 = vcmp.lt.s32.totalorder %v275, 0
      %vm280 = vmand %vm278, %vm276
      %vm281 = vmand %vm279, %vm277
      %v282 = vadd.s32 %v268, 16
      %v283 = vadd.s32 %v275, 16
      %v284 = vsel %vm280, %v282, %v268
      %v285 = vsel %vm281, %v283, %v275
      %vm286 = vcmp.gt.s32.totalorder %v284, 0
      %vm287 = vcmp.gt.s32.totalorder %v285, 0
      %v288 = vsel %vm286, 1, 0
      %v289 = vsel %vm287, 1, 0
      %v290 = vcvt.s32.f32 %v288
      %v291 = vcvt.s32.f32 %v289
      %v292 = vpack.c.bf16 %v291, %v290
      %vm293 = vcmp.lt.s32.totalorder %v284, 15
      %vm294 = vcmp.lt.s32.totalorder %v285, 15
      %v295 = vsel %vm293, 1, 0
      %v296 = vsel %vm294, 1, 0
      %v297 = vcvt.s32.f32 %v295
      %v298 = vcvt.s32.f32 %v296
      %v299 = vpack.c.bf16 %v298, %v297
      %v301 = vunpack.c.l.b16 %v258
      %v302 = vunpack.c.h.b16 %v258
      %v303 = vpack.c.b16 %v301, %v301
      %v304 = vpack.c.b16 %v302, %v302
      %305 = vrot.lane.b32.xlu0 %v303, 17
      %v306 = vpop.permute.xlu0 %305
      %307 = vrot.lane.b32.xlu0 %v304, 17
      %v308 = vpop.permute.xlu0 %307
      %vm309 = vcmask 138240
      %v310 = vsel %vm309, %v306, %v308
      %vm312 = vcmask 138240
      %v315 = vsel %vm312, 0, %v306
      %v317 = vunpack.c.l.bf16 %v315
      %v318 = vunpack.c.l.bf16 %v310
      %v319 = vunpack.c.l.bf16 %v292
      %v320 = vunpack.c.h.bf16 %v292
      %v321 = vmul.f32 %v317, %v319
      %v322 = vmul.f32 %v318, %v320
      %v323 = vpack.c.bf16 %v322, %v321
      %324 = vrot.lane.b32.xlu0 %v303, 16
      %v325 = vpop.permute.xlu0 %324
      %326 = vrot.lane.b32.xlu0 %v304, 16
      %v327 = vpop.permute.xlu0 %326
      %vm328 = vcmask 130048
      %v329 = vsel %vm328, %v325, %v327
      %vm330 = vcmask 130048
      %v332 = vsel %vm330, 0, %v325
      %333 = vrot.lane.b32.xlu0 %v303, 15
      %v334 = vpop.permute.xlu0 %333
      %335 = vrot.lane.b32.xlu0 %v304, 15
      %v336 = vpop.permute.xlu0 %335
      %vm337 = vcmask 121856
      %v338 = vsel %vm337, %v334, %v336
      %vm340 = vcmask 121856
      %v342 = vsel %vm340, 0, %v334
      %v344 = vunpack.c.l.bf16 %v342
      %v345 = vunpack.c.l.bf16 %v338
      %v346 = vunpack.c.l.bf16 %v299
      %v347 = vunpack.c.h.bf16 %v299
      %v348 = vmul.f32 %v344, %v346
      %v349 = vmul.f32 %v345, %v347
      %v350 = vpack.c.bf16 %v349, %v348
      %351 = vrot.lane.b32.xlu0 %v303, 1
      %v352 = vpop.permute.xlu0 %351
      %353 = vrot.lane.b32.xlu0 %v304, 1
      %v354 = vpop.permute.xlu0 %353
      %vm355 = vcmask 7168
      %v356 = vsel %vm355, %v352, %v354
      %vm358 = vcmask 7168
      %v360 = vsel %vm358, 0, %v352
      %v362 = vunpack.c.l.bf16 %v360
      %v363 = vunpack.c.l.bf16 %v356
      %v364 = vmul.f32 %v362, %v319
      %v365 = vmul.f32 %v363, %v320
      %v366 = vpack.c.bf16 %v365, %v364
      %367 = vrot.lane.b32.xlu0 %v303, 127
      %v368 = vpop.permute.xlu0 %367
      %369 = vrot.lane.b32.xlu0 %v304, 127
      %v370 = vpop.permute.xlu0 %369
      %vm371 = vcmask 1039360
      %v372 = vsel %vm371, %v368, %v370
      %vm374 = vcmask 1039360
      %v376 = vsel %vm374, %v370, 0
      %v378 = vunpack.c.l.bf16 %v372
      %v379 = vunpack.c.l.bf16 %v376
      %v380 = vmul.f32 %v378, %v346
      %v381 = vmul.f32 %v379, %v347
      %v382 = vpack.c.bf16 %v381, %v380
      %383 = vrot.lane.b32.xlu0 %v303, 113
      %v384 = vpop.permute.xlu0 %383
      %385 = vrot.lane.b32.xlu0 %v304, 113
      %v386 = vpop.permute.xlu0 %385
      %vm387 = vcmask 924672
      %v388 = vsel %vm387, %v384, %v386
      %vm390 = vcmask 924672
      %v392 = vsel %vm390, %v386, 0
      %v394 = vunpack.c.l.bf16 %v388
      %v395 = vunpack.c.l.bf16 %v392
      %v396 = vmul.f32 %v394, %v319
      %v397 = vmul.f32 %v395, %v320
      %v398 = vpack.c.bf16 %v397, %v396
      %399 = vrot.lane.b32.xlu0 %v303, 112
      %v400 = vpop.permute.xlu0 %399
      %401 = vrot.lane.b32.xlu0 %v304, 112
      %v402 = vpop.permute.xlu0 %401
      %vm403 = vcmask 916480
      %v404 = vsel %vm403, %v400, %v402
      %vm405 = vcmask 916480
      %v407 = vsel %vm405, %v402, 0
      %408 = vrot.lane.b32.xlu0 %v303, 111
      %v409 = vpop.permute.xlu0 %408
      %410 = vrot.lane.b32.xlu0 %v304, 111
      %v411 = vpop.permute.xlu0 %410
      %vm412 = vcmask 908288
      %v413 = vsel %vm412, %v409, %v411
      %vm415 = vcmask 908288
      %v417 = vsel %vm415, %v411, 0
      %v419 = vunpack.c.l.bf16 %v413
      %v420 = vunpack.c.l.bf16 %v417
      %v421 = vmul.f32 %v419, %v346
      %v422 = vmul.f32 %v420, %v347
      %v423 = vpack.c.bf16 %v422, %v421
      %v425 = vunpack.c.l.b16 %v323
      %v426 = vunpack.c.h.b16 %v323
      %v427 = vpack.c.b16 %v425, %v425
      %v428 = vpack.c.b16 %v426, %v426
      %v430 = vrot.slane %v332, 4
      %v431 = vrot.slane %v329, 4
      %v433 = vunpack.c.l.b16 %v350
      %v434 = vunpack.c.h.b16 %v350
      %v435 = vpack.c.b16 %v433, %v433
      %v436 = vpack.c.b16 %v434, %v434
      %v438 = vunpack.c.l.b16 %v366
      %v439 = vunpack.c.h.b16 %v366
      %v440 = vpack.c.b16 %v438, %v438
      %v441 = vpack.c.b16 %v439, %v439
      %v443 = vunpack.c.l.b16 %v382
      %v444 = vunpack.c.h.b16 %v382
      %v445 = vpack.c.b16 %v443, %v443
      %v446 = vpack.c.b16 %v444, %v444
      %v448 = vunpack.c.l.b16 %v398
      %v449 = vunpack.c.h.b16 %v398
      %v450 = vpack.c.b16 %v448, %v448
      %v451 = vpack.c.b16 %v449, %v449
      %v453 = vrot.slane %v404, 4
      %v454 = vrot.slane %v407, 4
      %v456 = vunpack.c.l.b16 %v423
      %v457 = vunpack.c.h.b16 %v423
      %v458 = vpack.c.b16 %v456, %v456
      %v459 = vpack.c.b16 %v457, %v457
      %vm460 = vcmask 1043456
      %v463 = vsel %vm460, %v427, %v430
      %v467 = vsel %vm460, %v428, %v431
      %v471 = vsel %vm460, %v435, %v440
      %v475 = vsel %vm460, %v436, %v441
      %v479 = vsel %vm460, %v303, %v445
      %v483 = vsel %vm460, %v304, %v446
      %v487 = vsel %vm460, %v450, %v453
      %v491 = vsel %vm460, %v451, %v454
      %v493 = vld [vmem:[%s3] sm:$0xf]
      %vm494 = vcmask 588800
      %v496 = vsel %vm494, %v493, 0
      %v499 = vsel %vm460, %v458, 0
      %v502 = vsel %vm460, %v459, 0
      %504 = vmatpush.bf16.msra.mxu0 0
      %505 = vmatpush.bf16.msra.mxu0 0
      %506 = vmatpush.bf16.msra.mxu0 0
      %507 = vmatpush.bf16.msra.mxu0 %v499
      %508 = vmatpush.bf16.msra.mxu0 %v487
      %509 = vmatpush.bf16.msra.mxu0 %v479
      %510 = vmatpush.bf16.msra.mxu0 %v471
      %511 = vmatpush.bf16.msra.mxu0 %v463
      %512 = vmatmul.bf16.gmra.mxu0 %v496
      %v513 = vpop.f32.mrf.mxu0
      %v514 = vadd.f32 0.0, %v513
      %v515 = vpop.f32.mrf.mxu0
      %516 = vdwg.mxu0
      %517 = vmatpush.bf16.msra.mxu0 0
      %518 = vmatpush.bf16.msra.mxu0 0
      %519 = vmatpush.bf16.msra.mxu0 0
      %520 = vmatpush.bf16.msra.mxu0 %v502
      %521 = vmatpush.bf16.msra.mxu0 %v491
      %522 = vmatpush.bf16.msra.mxu0 %v483
      %523 = vmatpush.bf16.msra.mxu0 %v475
      %524 = vmatpush.bf16.msra.mxu0 %v467
      %525 = vmatmul.bf16.gmra.mxu0 %v496
      %v526 = vpop.f32.mrf.mxu0
      %v527 = vadd.f32 0.0, %v526
      %v528 = vpop.f32.mrf.mxu0
      %529 = vdwg.mxu0
      %v530 = vadd.f32 %v514, %v527
      %531 = vadd.xlane.f32.xlu0 %v530
      %v532 = vpop.xlane.xlu0 %531
      %v533 = vmul.f32 %v514, %v514
      %v534 = vmul.f32 %v527, %v527
      %v535 = vadd.f32 %v533, %v534
      %536 = vadd.xlane.f32.xlu0 %v535
      %v537 = vpop.xlane.xlu0 %536
      %v538 = vsel %vm358, %v532, %v537
      %vm539 = vcmask 15360
      %540 = vst.msk [vmem:[%s235] sm:$0xff] %vm539, %v538
      %v541 = vpack.c.bf16 %v527, %v514
      %542 = vst [vmem:[%s231] sm:$0xff] %v541
      %p543 = scmp.lt.s32.totalorder %s17, 1
      %s544 = scalar_select %p543, %s17, 1
      %s545 = smul.addr %s544, 2
      %s546 = smul.addr %s545, 4
      %s547 = scalar_lea.vmem %s4, %s546
      %p548 = scmp.lt.s32.totalorder %s17, 1
      %s549 = scalar_select %p548, %s17, 1
      %s550 = smul.addr %s549, 8
      %s551 = scalar_lea.vmem %s5, %s550
      // Predicated region
      $region37: #{identity_block_forward.5} parent=35 // pred_check
        %p552 = pneg %p124
      $region38: #{identity_block_forward.5} parent=35 // pred_check_branch
        %554 = sbr.rel (%p552) target = $region40
      $region39: #{identity_block_forward.5} parent=35 // pred_region
        _
      $region40: #{identity_block_forward.5} parent=35 // pred_fallthru
        _
      // Predicated region
      $region41: #{identity_block_forward.5} parent=35 // pred_check
        %p555 = pneg %p150
      $region42: #{identity_block_forward.5} parent=35 // pred_check_branch
        %557 = sbr.rel (%p555) target = $region44
      $region43: #{identity_block_forward.5} parent=35 // pred_region
        _
      $region44: #{identity_block_forward.5} parent=35 // pred_fallthru
        _
    $region36: #{identity_block_forward.5} parent=5 // pred_fallthru
      _
    %p558 = scmp.le.s32.totalorder 2, %s12
    // Predicated region
    $region45: #{identity_block_forward.5} parent=5 // pred_check
      %p559 = pneg %p558
    $region46: #{identity_block_forward.5} parent=5 // pred_check_branch
      %561 = sbr.rel (%p559) target = $region48
    $region47: #{identity_block_forward.5} parent=5 // pred_region
      %s562 = ssub.s32 %s12, 2
      // Predicated region
      $region49: #{identity_block_forward.5} parent=47 // pred_check
        %p563 = pneg %p130
      $region50: #{identity_block_forward.5} parent=47 // pred_check_branch
        %565 = sbr.rel (%p563) target = $region52
      $region51: #{identity_block_forward.5} parent=47 // pred_region
        %p566 = scmp.lt.s32.totalorder %s18, 1
        %s567 = scalar_select %p566, %s18, 1
        %s568 = smul.addr %s567, 2
        %s569 = smul.addr %s568, 4
        %s570 = scalar_lea.vmem %s4, %s569
      $region52: #{identity_block_forward.5} parent=47 // pred_fallthru
        _
      // Predicated region
      $region53: #{identity_block_forward.5} parent=47 // pred_check
        %p571 = pneg %p156
      $region54: #{identity_block_forward.5} parent=47 // pred_check_branch
        %573 = sbr.rel (%p571) target = $region56
      $region55: #{identity_block_forward.5} parent=47 // pred_region
        %p574 = scmp.lt.s32.totalorder %s18, 1
        %s575 = scalar_select %p574, %s18, 1
        %s576 = smul.addr %s575, 8
        %s577 = scalar_lea.vmem %s5, %s576
      $region56: #{identity_block_forward.5} parent=47 // pred_fallthru
        _
    $region48: #{identity_block_forward.5} parent=5 // pred_fallthru
      _
  $region6: #{identity_block_forward.5} parent=0 // loop_footer
    %s16 = sadd.s32 1, %s12
  $region7: #{identity_block_forward.5} parent=0 // loop_footer_branch
    %11 = sbr.rel target = $region3
  $region8: #{identity_block_forward.5} parent=0 // loop_exit
    _

// kernel: identity_block_forward.7
$region0: #{identity_block_forward.7}
  #allocation0 [shape = 'u32[]', space=smem, size = 0x4, offset = 0x4, fixed_abs, tag = 'smem constant byte address 0x4 - core index']
  #allocation1 [shape = 'u32[72,128]{1,0:T(1,128)}', space=vmem, size = 0x9000, scoped, tag = 'internal scratch']
  %s0 = inlined_call_operand.vmem [shape: bf16[2,8,256], index: 0, kind: input, shape index: {}]
  %s1 = inlined_call_operand.vmem [shape: f32[8,1], index: 1, kind: input, shape index: {}]
  %s2 = inlined_call_operand.vmem [shape: f32[8,1], index: 2, kind: input, shape index: {}]
  %s3 = inlined_call_operand.vmem [shape: bf16[4,8], index: 3, kind: input, shape index: {}]
  %s4 = inlined_call_operand.vmem [shape: f32[4,1], index: 4, kind: input, shape index: {}]
  %s5 = inlined_call_operand.vmem [shape: f32[4,1], index: 5, kind: input, shape index: {}]
  %s6 = inlined_call_operand.vmem [shape: f32[2,4,256], index: 6, kind: input, shape index: {}]
  %s7 = inlined_call_operand.vmem [shape: f32[2,4,256], index: 7, kind: output, shape index: {}]
  %s8 = sld [smem:[#allocation0]]
  $region61: #{identity_block_forward.7} parent=0
    _
  %s10 = ssub.s32 1, %s8
  %s11 = scalar_select 0, %s10, %s8
  loop: start=0, step=1, limit=4
  $region2: #{identity_block_forward.7} parent=0 // loop_pre_header
    _
  $region3: #{identity_block_forward.7} parent=0 // loop_header
    %s13 = sphi 0, %s17
    %p14 = scmp.ge.s32.totalorder %s13, 4
    %s23 = sphi 0, %s25
    %s26 = sphi 0, %s23
    %s27 = sphi 0, %s26
    %s43 = sphi 0, %s27
    %s47 = sphi 0, %s47
    %s49 = sphi 0, %s47
    %s50 = sphi 0, %s49
    %s64 = sphi 0, %s50
    %s68 = sphi 0, %s68
    %s70 = sphi 0, %s68
    %s71 = sphi 0, %s70
    %s85 = sphi 0, %s71
    %s89 = sphi 0, %s89
    %s91 = sphi 0, %s89
    %s92 = sphi 0, %s91
    %s106 = sphi 0, %s92
    %s110 = sphi 0, %s110
    %s112 = sphi 0, %s110
    %s113 = sphi 0, %s112
    %s127 = sphi 0, %s113
    %s131 = sphi 0, %s131
    %s133 = sphi 0, %s131
    %s134 = sphi 0, %s133
    %s148 = sphi 0, %s134
    %s154 = sphi 0, %s156
    %s157 = sphi 0, %s154
    %s158 = sphi 0, %s157
    %s174 = sphi 0, %s158
    %s180 = sphi 0, %s182
    %s183 = sphi 0, %s180
    %s184 = sphi 0, %s183
    %s200 = sphi 0, %s184
  $region4: #{identity_block_forward.7} parent=0 // loop_header_branch
    %16 = sbr.rel (%p14) target = $region8
  $region5: #{identity_block_forward.7} parent=0 // loop_body
    %s18 = ssub.s32 %s13, 1
    %s19 = ssub.s32 %s13, 2
    %s20 = sadd.s32 %s13, 1
    %s21 = ssub.s32 %s13, %s20
    %p22 = scmp.eq.s32.totalorder %s21, 0
    %s24 = sadd.s32 %s23, 1
    %s25 = scalar_select %p22, %s23, %s24
    %p28 = pneg %p22
    %p29 = scmp.eq.s32.totalorder %s13, 1
    %p30 = por %p28, %p29
    %p31 = scmp.ne.s32.totalorder %s23, %s26
    %p32 = scmp.eq.s32.totalorder %s13, 0
    %p33 = por %p31, %p32
    %p34 = scmp.ne.s32.totalorder %s23, %s26
    %p35 = scmp.eq.s32.totalorder %s18, 1
    %p36 = por %p34, %p35
    %p37 = scmp.ne.s32.totalorder %s26, %s27
    %p38 = scmp.eq.s32.totalorder %s18, 0
    %p39 = por %p37, %p38
    %p40 = scmp.ne.s32.totalorder %s26, %s27
    %p41 = scmp.eq.s32.totalorder %s19, 1
    %p42 = por %p40, %p41
    %p44 = scmp.ne.s32.totalorder %s27, %s43
    %p45 = scmp.eq.s32.totalorder %s19, 0
    %p46 = por %p44, %p45
    %s48 = sadd.s32 %s47, 1
    %p51 = scmp.eq.s32.totalorder %s13, 1
    %p52 = scmp.ne.s32.totalorder %s47, %s49
    %p53 = scmp.eq.s32.totalorder %s13, 0
    %p54 = por %p52, %p53
    %p55 = scmp.ne.s32.totalorder %s47, %s49
    %p56 = scmp.eq.s32.totalorder %s18, 1
    %p57 = por %p55, %p56
    %p58 = scmp.ne.s32.totalorder %s49, %s50
    %p59 = scmp.eq.s32.totalorder %s18, 0
    %p60 = por %p58, %p59
    %p61 = scmp.ne.s32.totalorder %s49, %s50
    %p62 = scmp.eq.s32.totalorder %s19, 1
    %p63 = por %p61, %p62
    %p65 = scmp.ne.s32.totalorder %s50, %s64
    %p66 = scmp.eq.s32.totalorder %s19, 0
    %p67 = por %p65, %p66
    %s69 = sadd.s32 %s68, 1
    %p72 = scmp.eq.s32.totalorder %s13, 1
    %p73 = scmp.ne.s32.totalorder %s68, %s70
    %p74 = scmp.eq.s32.totalorder %s13, 0
    %p75 = por %p73, %p74
    %p76 = scmp.ne.s32.totalorder %s68, %s70
    %p77 = scmp.eq.s32.totalorder %s18, 1
    %p78 = por %p76, %p77
    %p79 = scmp.ne.s32.totalorder %s70, %s71
    %p80 = scmp.eq.s32.totalorder %s18, 0
    %p81 = por %p79, %p80
    %p82 = scmp.ne.s32.totalorder %s70, %s71
    %p83 = scmp.eq.s32.totalorder %s19, 1
    %p84 = por %p82, %p83
    %p86 = scmp.ne.s32.totalorder %s71, %s85
    %p87 = scmp.eq.s32.totalorder %s19, 0
    %p88 = por %p86, %p87
    %s90 = sadd.s32 %s89, 1
    %p93 = scmp.eq.s32.totalorder %s13, 1
    %p94 = scmp.ne.s32.totalorder %s89, %s91
    %p95 = scmp.eq.s32.totalorder %s13, 0
    %p96 = por %p94, %p95
    %p97 = scmp.ne.s32.totalorder %s89, %s91
    %p98 = scmp.eq.s32.totalorder %s18, 1
    %p99 = por %p97, %p98
    %p100 = scmp.ne.s32.totalorder %s91, %s92
    %p101 = scmp.eq.s32.totalorder %s18, 0
    %p102 = por %p100, %p101
    %p103 = scmp.ne.s32.totalorder %s91, %s92
    %p104 = scmp.eq.s32.totalorder %s19, 1
    %p105 = por %p103, %p104
    %p107 = scmp.ne.s32.totalorder %s92, %s106
    %p108 = scmp.eq.s32.totalorder %s19, 0
    %p109 = por %p107, %p108
    %s111 = sadd.s32 %s110, 1
    %p114 = scmp.eq.s32.totalorder %s13, 1
    %p115 = scmp.ne.s32.totalorder %s110, %s112
    %p116 = scmp.eq.s32.totalorder %s13, 0
    %p117 = por %p115, %p116
    %p118 = scmp.ne.s32.totalorder %s110, %s112
    %p119 = scmp.eq.s32.totalorder %s18, 1
    %p120 = por %p118, %p119
    %p121 = scmp.ne.s32.totalorder %s112, %s113
    %p122 = scmp.eq.s32.totalorder %s18, 0
    %p123 = por %p121, %p122
    %p124 = scmp.ne.s32.totalorder %s112, %s113
    %p125 = scmp.eq.s32.totalorder %s19, 1
    %p126 = por %p124, %p125
    %p128 = scmp.ne.s32.totalorder %s113, %s127
    %p129 = scmp.eq.s32.totalorder %s19, 0
    %p130 = por %p128, %p129
    %s132 = sadd.s32 %s131, 1
    %p135 = scmp.eq.s32.totalorder %s13, 1
    %p136 = scmp.ne.s32.totalorder %s131, %s133
    %p137 = scmp.eq.s32.totalorder %s13, 0
    %p138 = por %p136, %p137
    %p139 = scmp.ne.s32.totalorder %s131, %s133
    %p140 = scmp.eq.s32.totalorder %s18, 1
    %p141 = por %p139, %p140
    %p142 = scmp.ne.s32.totalorder %s133, %s134
    %p143 = scmp.eq.s32.totalorder %s18, 0
    %p144 = por %p142, %p143
    %p145 = scmp.ne.s32.totalorder %s133, %s134
    %p146 = scmp.eq.s32.totalorder %s19, 1
    %p147 = por %p145, %p146
    %p149 = scmp.ne.s32.totalorder %s134, %s148
    %p150 = scmp.eq.s32.totalorder %s19, 0
    %p151 = por %p149, %p150
    %s152 = ssub.s32 %s13, %s20
    %p153 = scmp.eq.s32.totalorder %s152, 0
    %s155 = sadd.s32 %s154, 1
    %s156 = scalar_select %p153, %s154, %s155
    %p159 = pneg %p153
    %p160 = scmp.eq.s32.totalorder %s13, 1
    %p161 = por %p159, %p160
    %p162 = scmp.ne.s32.totalorder %s154, %s157
    %p163 = scmp.eq.s32.totalorder %s13, 0
    %p164 = por %p162, %p163
    %p165 = scmp.ne.s32.totalorder %s154, %s157
    %p166 = scmp.eq.s32.totalorder %s18, 1
    %p167 = por %p165, %p166
    %p168 = scmp.ne.s32.totalorder %s157, %s158
    %p169 = scmp.eq.s32.totalorder %s18, 0
    %p170 = por %p168, %p169
    %p171 = scmp.ne.s32.totalorder %s157, %s158
    %p172 = scmp.eq.s32.totalorder %s19, 1
    %p173 = por %p171, %p172
    %p175 = scmp.ne.s32.totalorder %s158, %s174
    %p176 = scmp.eq.s32.totalorder %s19, 0
    %p177 = por %p175, %p176
    %s178 = ssub.s32 %s13, %s20
    %p179 = scmp.eq.s32.totalorder %s178, 0
    %s181 = sadd.s32 %s180, 1
    %s182 = scalar_select %p179, %s180, %s181
    %p185 = pneg %p179
    %p186 = scmp.eq.s32.totalorder %s13, 1
    %p187 = por %p185, %p186
    %p188 = scmp.ne.s32.totalorder %s180, %s183
    %p189 = scmp.eq.s32.totalorder %s13, 0
    %p190 = por %p188, %p189
    %p191 = scmp.ne.s32.totalorder %s180, %s183
    %p192 = scmp.eq.s32.totalorder %s18, 1
    %p193 = por %p191, %p192
    %p194 = scmp.ne.s32.totalorder %s183, %s184
    %p195 = scmp.eq.s32.totalorder %s18, 0
    %p196 = por %p194, %p195
    %p197 = scmp.ne.s32.totalorder %s183, %s184
    %p198 = scmp.eq.s32.totalorder %s19, 1
    %p199 = por %p197, %p198
    %p201 = scmp.ne.s32.totalorder %s184, %s200
    %p202 = scmp.eq.s32.totalorder %s19, 0
    %p203 = por %p201, %p202
    %p204 = scmp.le.s32.totalorder 1, %s13
    %p205 = scmp.lt.s32.totalorder %s13, 3
    %p206 = pnand %p204, %p205
    %p207 = pneg %p206
    // Predicated region
    $region9: #{identity_block_forward.7} parent=5 // pred_check
      _
    $region10: #{identity_block_forward.7} parent=5 // pred_check_branch
      %209 = sbr.rel (%p206) target = $region12
    $region11: #{identity_block_forward.7} parent=5 // pred_region
      %s210 = ssub.s32 %s13, 1
      // Predicated region
      $region13: #{identity_block_forward.7} parent=11 // pred_check
        %p211 = pneg %p60
      $region14: #{identity_block_forward.7} parent=11 // pred_check_branch
        %213 = sbr.rel (%p211) target = $region16
      $region15: #{identity_block_forward.7} parent=11 // pred_region
        _
      $region16: #{identity_block_forward.7} parent=11 // pred_fallthru
        _
      // Predicated region
      $region17: #{identity_block_forward.7} parent=11 // pred_check
        %p214 = pneg %p81
      $region18: #{identity_block_forward.7} parent=11 // pred_check_branch
        %216 = sbr.rel (%p214) target = $region20
      $region19: #{identity_block_forward.7} parent=11 // pred_region
        _
      $region20: #{identity_block_forward.7} parent=11 // pred_fallthru
        _
      // Predicated region
      $region21: #{identity_block_forward.7} parent=11 // pred_check
        %p217 = pneg %p102
      $region22: #{identity_block_forward.7} parent=11 // pred_check_branch
        %219 = sbr.rel (%p217) target = $region24
      $region23: #{identity_block_forward.7} parent=11 // pred_region
        _
      $region24: #{identity_block_forward.7} parent=11 // pred_fallthru
        _
      // Predicated region
      $region25: #{identity_block_forward.7} parent=11 // pred_check
        %p220 = pneg %p123
      $region26: #{identity_block_forward.7} parent=11 // pred_check_branch
        %222 = sbr.rel (%p220) target = $region28
      $region27: #{identity_block_forward.7} parent=11 // pred_region
        _
      $region28: #{identity_block_forward.7} parent=11 // pred_fallthru
        _
      // Predicated region
      $region29: #{identity_block_forward.7} parent=11 // pred_check
        %p223 = pneg %p144
      $region30: #{identity_block_forward.7} parent=11 // pred_check_branch
        %225 = sbr.rel (%p223) target = $region32
      $region31: #{identity_block_forward.7} parent=11 // pred_region
        _
      $region32: #{identity_block_forward.7} parent=11 // pred_fallthru
        _
    $region12: #{identity_block_forward.7} parent=5 // pred_fallthru
      _
    %p226 = scmp.lt.s32.totalorder %s13, 2
    // Predicated region
    $region33: #{identity_block_forward.7} parent=5 // pred_check
      %p227 = pneg %p226
    $region34: #{identity_block_forward.7} parent=5 // pred_check_branch
      %229 = sbr.rel (%p227) target = $region36
    $region35: #{identity_block_forward.7} parent=5 // pred_region
      // Predicated region
      $region37: #{identity_block_forward.7} parent=35 // pred_check
        %p230 = pneg %p33
      $region38: #{identity_block_forward.7} parent=35 // pred_check_branch
        %232 = sbr.rel (%p230) target = $region40
      $region39: #{identity_block_forward.7} parent=35 // pred_region
        %p233 = scmp.lt.s32.totalorder %s13, 1
        %s234 = scalar_select %p233, %s13, 1
        %s235 = smul.addr %s234, 2
        %s236 = smul.addr %s235, 4
        %s237 = scalar_lea.vmem %s0, %s236
      $region40: #{identity_block_forward.7} parent=35 // pred_fallthru
        _
      // Predicated region
      $region41: #{identity_block_forward.7} parent=35 // pred_check
        %p238 = pneg %p164
      $region42: #{identity_block_forward.7} parent=35 // pred_check_branch
        %240 = sbr.rel (%p238) target = $region44
      $region43: #{identity_block_forward.7} parent=35 // pred_region
        %p241 = scmp.lt.s32.totalorder %s13, 1
        %s242 = scalar_select %p241, %s13, 1
        %s243 = smul.addr %s242, 2
        %s244 = smul.addr %s243, 4
        %s245 = scalar_lea.vmem %s6, %s244
      $region44: #{identity_block_forward.7} parent=35 // pred_fallthru
        _
    $region36: #{identity_block_forward.7} parent=5 // pred_fallthru
      _
    %p246 = scmp.le.s32.totalorder 1, %s13
    %p247 = scmp.lt.s32.totalorder %s13, 3
    %p248 = pnand %p246, %p247
    %p249 = pneg %p248
    // Predicated region
    $region45: #{identity_block_forward.7} parent=5 // pred_check
      _
    $region46: #{identity_block_forward.7} parent=5 // pred_check_branch
      %251 = sbr.rel (%p248) target = $region48
    $region47: #{identity_block_forward.7} parent=5 // pred_region
      %s252 = ssub.s32 %s13, 1
      %p253 = scmp.lt.s32.totalorder %s18, 1
      %s254 = scalar_select %p253, %s18, 1
      %s255 = smul.addr %s254, 2
      %s256 = smul.addr %s255, 4
      %s257 = scalar_lea.vmem %s0, %s256
      %p258 = pneg %p39
      %p259 = pneg %p36
      %p260 = pneg %p60
      %p261 = pneg %p57
      %p262 = pneg %p81
      %p263 = pneg %p78
      %p264 = pneg %p102
      %p265 = pneg %p99
      %p266 = pneg %p123
      %p267 = pneg %p120
      %p268 = pneg %p144
      %p269 = pneg %p141
      %p270 = scmp.lt.s32.totalorder %s18, 1
      %s271 = scalar_select %p270, %s18, 1
      %s272 = smul.addr %s271, 2
      %s273 = smul.addr %s272, 4
      %s274 = scalar_lea.vmem %s6, %s273
      %p275 = pneg %p170
      %p276 = pneg %p167
      %p277 = pneg %p196
      %p278 = pneg %p193
      %p279 = scmp.lt.s32.totalorder %s18, 1
      %s280 = scalar_select %p279, %s18, 1
      %s281 = smul.addr %s280, 2
      %s282 = smul.addr %s281, 4
      %s283 = scalar_lea.vmem %s7, %s282
      %p284 = scmp.lt.s32.totalorder %s18, 1
      %s285 = scalar_select %p284, %s18, 1
      %s286 = smul.addr %s285, 2
      %s287 = smul.addr %s286, 4
      %s288 = scalar_lea.vmem %s0, %s287
      %p289 = scmp.lt.s32.totalorder %s18, 1
      %s290 = scalar_select %p289, %s18, 1
      %s291 = smul.addr %s290, 2
      %s292 = smul.addr %s291, 4
      %s293 = scalar_lea.vmem %s6, %s292
      %p294 = scmp.lt.s32.totalorder %s18, 1
      %s295 = scalar_select %p294, %s18, 1
      %s296 = smul.addr %s295, 2
      %s297 = smul.addr %s296, 4
      %s298 = scalar_lea.vmem %s7, %s297
      %v300 = vld [vmem:[%s288] sm:$0xff]
      %v301 = vld [vmem:[%s1] sm:$0xff]
      %v302 = vld [vmem:[%s2] sm:$0xff]
      %v303 = vld [vmem:[%s3] sm:$0x3]
      %v304 = vunpack.c.l.bf16 %v300
      %v305 = vunpack.c.h.bf16 %v300
      %307 = vset.pattern.permute.xlu0 0
      %308 = vperm.xlu0 %307, %v301
      %v309 = vpop.permute.xlu0 %308
      %v311 = vmul.f32 %v304, %v309
      %v312 = vmul.f32 %v305, %v309
      %314 = vset.pattern.permute.xlu0 0
      %315 = vperm.xlu0 %314, %v302
      %v316 = vpop.permute.xlu0 %315
      %v318 = vadd.f32 %v311, %v316
      %v319 = vadd.f32 %v312, %v316
      %v320 = vmax.f32 %v318, 0.0
      %v321 = vmax.f32 %v319, 0.0
      %v322 = vpack.c.bf16 %v320, %v320
      %v323 = vpack.c.bf16 %v321, %v321
      %vm324 = vcmask 64512
      %v326 = vsel %vm324, %v303, 0
      %vm328 = vcmask 1043456
      %v330 = vsel %vm328, %v322, 0
      %v333 = vsel %vm328, %v323, 0
      %335 = vmatpush.bf16.msra.mxu0 0
      %336 = vmatpush.bf16.msra.mxu0 0
      %337 = vmatpush.bf16.msra.mxu0 0
      %338 = vmatpush.bf16.msra.mxu0 0
      %339 = vmatpush.bf16.msra.mxu0 0
      %340 = vmatpush.bf16.msra.mxu0 0
      %341 = vmatpush.bf16.msra.mxu0 0
      %342 = vmatpush.bf16.msra.mxu0 %v330
      %343 = vmatmul.bf16.gmra.mxu0 %v326
      %v344 = vpop.f32.mrf.mxu0
      %v345 = vadd.f32 0.0, %v344
      %v346 = vpop.f32.mrf.mxu0
      %347 = vdwg.mxu0
      %348 = vmatpush.bf16.msra.mxu0 0
      %349 = vmatpush.bf16.msra.mxu0 0
      %350 = vmatpush.bf16.msra.mxu0 0
      %351 = vmatpush.bf16.msra.mxu0 0
      %352 = vmatpush.bf16.msra.mxu0 0
      %353 = vmatpush.bf16.msra.mxu0 0
      %354 = vmatpush.bf16.msra.mxu0 0
      %355 = vmatpush.bf16.msra.mxu0 %v333
      %356 = vmatmul.bf16.gmra.mxu0 %v326
      %v357 = vpop.f32.mrf.mxu0
      %v358 = vadd.f32 0.0, %v357
      %v359 = vpop.f32.mrf.mxu0
      %360 = vdwg.mxu0
      %v361 = vld [vmem:[%s4] sm:$0xf]
      %363 = vset.pattern.permute.xlu0 0
      %364 = vperm.xlu0 %363, %v361
      %v365 = vpop.permute.xlu0 %364
      %v367 = vmul.f32 %v345, %v365
      %v368 = vmul.f32 %v358, %v365
      %v369 = vld [vmem:[%s5] sm:$0xf]
      %371 = vset.pattern.permute.xlu0 0
      %372 = vperm.xlu0 %371, %v369
      %v373 = vpop.permute.xlu0 %372
      %v375 = vadd.f32 %v367, %v373
      %v376 = vadd.f32 %v368, %v373
      %v377 = vld [vmem:[%s293] sm:$0xff]
      %379 = vst [vmem:[#allocation1] ss:$2 sm:$0xff] %v377
      %v380 = vld.sshfl [vmem:[#allocation1] sm:$0xff pattern:$0x75316420]
      %v381 = vld.sshfl [vmem:[#allocation1 + $0x8] sm:$0xff pattern:$0x75316420]
      %v384 = vadd.f32 %v375, %v380
      %v385 = vadd.f32 %v376, %v381
      %v386 = vmax.f32 %v384, 0.0
      %v387 = vmax.f32 %v385, 0.0
      %v390 = vrot.slane %v387, 4
      %v391 = vsel %vm328, %v386, %v390
      %393 = vst [vmem:[%s298] sm:$0xff] %v391
      %p394 = scmp.lt.s32.totalorder %s18, 1
      %s395 = scalar_select %p394, %s18, 1
      %s396 = smul.addr %s395, 2
      %s397 = smul.addr %s396, 4
      %s398 = scalar_lea.vmem %s7, %s397
      // Predicated region
      $region49: #{identity_block_forward.7} parent=47 // pred_check
        %p399 = pneg %p193
      $region50: #{identity_block_forward.7} parent=47 // pred_check_branch
        %401 = sbr.rel (%p399) target = $region52
      $region51: #{identity_block_forward.7} parent=47 // pred_region
        _
      $region52: #{identity_block_forward.7} parent=47 // pred_fallthru
        _
    $region48: #{identity_block_forward.7} parent=5 // pred_fallthru
      _
    %p402 = scmp.le.s32.totalorder 2, %s13
    // Predicated region
    $region53: #{identity_block_forward.7} parent=5 // pred_check
      %p403 = pneg %p402
    $region54: #{identity_block_forward.7} parent=5 // pred_check_branch
      %405 = sbr.rel (%p403) target = $region56
    $region55: #{identity_block_forward.7} parent=5 // pred_region
      %s406 = ssub.s32 %s13, 2
      // Predicated region
      $region57: #{identity_block_forward.7} parent=55 // pred_check
        %p407 = pneg %p199
      $region58: #{identity_block_forward.7} parent=55 // pred_check_branch
        %409 = sbr.rel (%p407) target = $region60
      $region59: #{identity_block_forward.7} parent=55 // pred_region
        %p410 = scmp.lt.s32.totalorder %s19, 1
        %s411 = scalar_select %p410, %s19, 1
        %s412 = smul.addr %s411, 2
        %s413 = smul.addr %s412, 4
        %s414 = scalar_lea.vmem %s7, %s413
      $region60: #{identity_block_forward.7} parent=55 // pred_fallthru
        _
    $region56: #{identity_block_forward.7} parent=5 // pred_fallthru
      _
  $region6: #{identity_block_forward.7} parent=0 // loop_footer
    %s17 = sadd.s32 1, %s13
  $region7: #{identity_block_forward.7} parent=0 // loop_footer_branch
    %12 = sbr.rel target = $region3
  $region8: #{identity_block_forward.7} parent=0 // loop_exit
    _

</llo_original>
